<compile_context>
chip_gen: v7x
topology: tpu7x:2x2x1
jax: 0.10.0
libtpu: 0.0.40
codegen_flags: <defaults>
</compile_context>

<pallas_src>
import functools

import jax
import jax.numpy as jnp
from jax.experimental import pallas as pl
from jax.experimental.pallas import tpu as pltpu


# > v5e's 16 MiB / v6e-v7x's 32 MiB scoped default, < v7x's 64 MiB physical.
_VMEM_LIMIT = 48 * 1024 * 1024


def _attn_mlp1_kernel(dim, num_heads,
                      x_ref, s_ref,
                      wq_ref, bq_ref, wkv_ref, bkv_ref,
                      wm_ref, bm_ref, w1x_ref, w1m_ref, b1_ref,
                      h1_ref, stats_ref,
                      kv_ref):
    """Pass 1: attention message + first MLP layer + InstanceNorm statistics."""
    f32 = jnp.float32
    bf16 = jnp.bfloat16
    d_model = dim * num_heads
    n_idx = pl.program_id(1)

    # K/V projection of `source` is shared by every N-tile of this batch
    # element: compute it once (fused K+V matmul) and cache in VMEM scratch.
    @pl.when(n_idx == 0)
    def _():
        s = s_ref[0].astype(bf16)                                       # (M, D)
        kv = jnp.dot(s, wkv_ref[...], preferred_element_type=f32) + bkv_ref[...]
        kv_ref[...] = kv.astype(bf16)                                   # (M, 2D)
        stats_ref[...] = jnp.zeros_like(stats_ref)

    x = x_ref[0]                                                        # (tn, D) f32
    xb = x.astype(bf16)
    q = (jnp.dot(xb, wq_ref[...], preferred_element_type=f32)
         + bq_ref[...]).astype(bf16)                                    # (tn, D)
    kv = kv_ref[...]                                                    # (M, 2D) bf16
    scale = 1.0 / (dim ** 0.5)

    # Multi-head scaled-dot-product attention (head-contiguous channels).
    head_outs = []
    for h in range(num_heads):                                          # static loop
        lo = h * dim
        qh = q[:, lo:lo + dim]                                          # (tn, dim)
        kh = kv[:, lo:lo + dim]                                         # (M, dim)
        vh = kv[:, d_model + lo:d_model + lo + dim]                     # (M, dim)
        # Contract the minor dims of both operands directly (no kh.T relayout).
        sc = jax.lax.dot_general(qh, kh, (((1,), (1,)), ((), ())),
                                 preferred_element_type=f32) * scale    # (tn, M)
        sc = sc - jnp.max(sc, axis=-1, keepdims=True)
        e = jnp.exp(sc)
        inv = pl.reciprocal(jnp.sum(e, axis=-1, keepdims=True), approx=True)
        p = (e * inv).astype(bf16)                                      # softmax over M
        head_outs.append(jnp.dot(p, vh, preferred_element_type=f32))    # (tn, dim)

    # Merge Conv1d(k=1): one (tn, D) @ (D, D) matmul on the concatenated heads.
    o_all = jnp.concatenate(head_outs, axis=-1).astype(bf16)            # (tn, D)
    msg = jnp.dot(o_all, wm_ref[...], preferred_element_type=f32) + bm_ref[...]

    # First MLP layer on concat([x, msg]); concat folded into split weights.
    h1 = (jnp.dot(xb, w1x_ref[...], preferred_element_type=f32)
          + jnp.dot(msg.astype(bf16), w1m_ref[...], preferred_element_type=f32)
          + b1_ref[...])                                                # (tn, 2D) f32
    h1_ref[0] = h1

    # InstanceNorm statistics accumulated across N-tiles (rows 0/1 of stats).
    stats_ref[0, 0:1, :] = stats_ref[0, 0:1, :] + jnp.sum(h1, axis=0, keepdims=True)
    stats_ref[0, 1:2, :] = stats_ref[0, 1:2, :] + jnp.sum(h1 * h1, axis=0, keepdims=True)


def _norm_mlp2_kernel(n_total,
                      h1_ref, stats_ref, w2_ref, b2_ref,
                      o_ref):
    """Pass 2: InstanceNorm1d (full-N stats, biased var, eps=1e-5) + ReLU + MLP layer 2."""
    f32 = jnp.float32
    h1 = h1_ref[0]                                                      # (tn, 2D) f32
    inv_n = 1.0 / n_total
    mean = stats_ref[0, 0:1, :] * inv_n                                 # (1, 2D)
    var = stats_ref[0, 1:2, :] * inv_n - mean * mean                    # biased variance
    hn = (h1 - mean) * jax.lax.rsqrt(var + 1e-5)
    hr = jnp.maximum(hn, 0.0)                                           # ReLU
    out = (jnp.dot(hr.astype(jnp.bfloat16), w2_ref[...],
                   preferred_element_type=f32) + b2_ref[...])
    o_ref[0] = out.astype(o_ref.dtype)


def make_params(key, d_model):
    """Deterministic synthetic parameters (shapes match the PyTorch module)."""
    D = d_model
    ks = jax.random.split(key, 11)
    w = lambda k, shape: jax.random.normal(k, shape, jnp.float32) * 0.1
    return dict(
        Wq=w(ks[0], (D, D)),        bq=w(ks[1], (D,)),
        Wk=w(ks[2], (D, D)),        bk=w(ks[3], (D,)),
        Wv=w(ks[4], (D, D)),        bv=w(ks[5], (D,)),
        Wm=w(ks[6], (D, D)),        bm=w(ks[7], (D,)),
        W1=w(ks[8], (2 * D, 2 * D)), b1=w(ks[9], (2 * D,)),
        W2=w(ks[10], (D, 2 * D)),    b2=jnp.zeros((D,), jnp.float32),  # nn.init.constant_(bias, 0)
    )


def prepare_params(params, num_heads):
    """One-time weight prep (hoisted out of the per-call path): head-contiguous
    channel permutation, transposes, K/V weight fusion, concat-folding of the
    first MLP layer, bf16 casts of all matmul weights (biases stay f32)."""
    bf16 = jnp.bfloat16
    D = params['Wq'].shape[0]
    dim = D // num_heads
    # PyTorch .view(B, dim, heads, N) means channel c == d*heads + h;
    # perm reorders channels to head-contiguous order c' = h*dim + d.
    perm = jnp.arange(D).reshape(dim, num_heads).T.reshape(-1)

    WqT = params['Wq'].T[:, perm]
    WkT = params['Wk'].T[:, perm]
    WvT = params['Wv'].T[:, perm]
    W1T = params['W1'].T                       # rows = input channels of MLP layer 1
    return dict(
        Wq=WqT.astype(bf16),
        bq=params['bq'][perm][None, :],
        Wkv=jnp.concatenate([WkT, WvT], axis=1).astype(bf16),           # (D, 2D)
        bkv=jnp.concatenate([params['bk'][perm], params['bv'][perm]])[None, :],
        Wm=params['Wm'].T[perm, :].astype(bf16),
        bm=params['bm'][None, :],
        W1x=W1T[:D, :].astype(bf16),
        W1m=W1T[D:, :].astype(bf16),
        b1=params['b1'][None, :],
        W2=params['W2'].T.astype(bf16),                                 # (2D, D)
        b2=params['b2'][None, :],
    )


def attentional_propagation(x_ncw, src_ncw, prepped, num_heads, *, tn_max=256):
    """x_ncw: (B, D, N), src_ncw: (B, D, M)  ->  (B, D, N)   (PyTorch NCW)."""
    B, D, N = x_ncw.shape
    M = src_ncw.shape[2]
    dim = D // num_heads
    D2 = 2 * D

    tn = N if N <= tn_max else tn_max
    # TODO(synk): pad N on the host and mask the tail tile when N % tn != 0.
    assert N % tn == 0, "N must be divisible by the N-tile size"
    n_tiles = N // tn

    x = jnp.transpose(x_ncw, (0, 2, 1))        # (B, N, D) channels-last
    s = jnp.transpose(src_ncw, (0, 2, 1))      # (B, M, D)

    def const_spec(arr):
        nd = arr.ndim
        return pl.BlockSpec(arr.shape, lambda b, n, _nd=nd: (0,) * _nd)

    # ---- pass 1: attention message + MLP layer 1 + InstanceNorm stats ----
    w1 = (prepped['Wq'], prepped['bq'], prepped['Wkv'], prepped['bkv'],
          prepped['Wm'], prepped['bm'], prepped['W1x'], prepped['W1m'],
          prepped['b1'])
    h1, stats = pl.pallas_call(
        functools.partial(_attn_mlp1_kernel, dim, num_heads),
        out_shape=(jax.ShapeDtypeStruct((B, N, D2), jnp.float32),
                   jax.ShapeDtypeStruct((B, 8, D2), jnp.float32)),
        grid=(B, n_tiles),
        in_specs=[pl.BlockSpec((1, tn, D), lambda b, n: (b, n, 0)),
                  pl.BlockSpec((1, M, D), lambda b, n: (b, 0, 0))]
                 + [const_spec(a) for a in w1],
        out_specs=[pl.BlockSpec((1, tn, D2), lambda b, n: (b, n, 0)),
                   pl.BlockSpec((1, 8, D2), lambda b, n: (b, 0, 0))],
        scratch_shapes=[pltpu.VMEM((M, D2), jnp.bfloat16)],
        compiler_params=pltpu.CompilerParams(
            dimension_semantics=("parallel", "arbitrary"),
            vmem_limit_bytes=_VMEM_LIMIT),
    )(x, s, *w1)

    # ---- pass 2: InstanceNorm (full-N stats) + ReLU + MLP layer 2 ----
    w2 = (prepped['W2'], prepped['b2'])
    out = pl.pallas_call(
        functools.partial(_norm_mlp2_kernel, float(N)),
        out_shape=jax.ShapeDtypeStruct((B, N, D), x.dtype),
        grid=(B, n_tiles),
        in_specs=[pl.BlockSpec((1, tn, D2), lambda b, n: (b, n, 0)),
                  pl.BlockSpec((1, 8, D2), lambda b, n: (b, 0, 0))]
                 + [const_spec(a) for a in w2],
        out_specs=pl.BlockSpec((1, tn, D), lambda b, n: (b, n, 0)),
        compiler_params=pltpu.CompilerParams(
            dimension_semantics=("parallel", "parallel"),
            vmem_limit_bytes=_VMEM_LIMIT),
    )(h1, stats, *w2)

    return jnp.transpose(out, (0, 2, 1))       # back to (B, D, N)


def ref_forward(x_ncw, s_ncw, params, num_heads):
    """Pure-JAX f32 reference mirroring the PyTorch forward exactly (NCW)."""
    D = x_ncw.shape[1]
    dim = D // num_heads

    def conv1(x, W, b):   # Conv1d(kernel_size=1)
        return jnp.einsum('oc,bcn->bon', W, x) + b[None, :, None]

    q = conv1(x_ncw, params['Wq'], params['bq'])
    k = conv1(s_ncw, params['Wk'], params['bk'])
    v = conv1(s_ncw, params['Wv'], params['bv'])
    B = q.shape[0]
    qh = q.reshape(B, dim, num_heads, -1)
    kh = k.reshape(B, dim, num_heads, -1)
    vh = v.reshape(B, dim, num_heads, -1)
    scores = jnp.einsum('bdhn,bdhm->bhnm', qh, kh) / (dim ** 0.5)
    prob = jax.nn.softmax(scores, axis=-1)
    o = jnp.einsum('bhnm,bdhm->bdhn', prob, vh)
    msg = conv1(o.reshape(B, D, -1), params['Wm'], params['bm'])
    cat = jnp.concatenate([x_ncw, msg], axis=1)
    h1 = conv1(cat, params['W1'], params['b1'])
    mean = h1.mean(axis=2, keepdims=True)
    var = ((h1 - mean) ** 2).mean(axis=2, keepdims=True)
    hn = (h1 - mean) / jnp.sqrt(var + 1e-5)
    hr = jnp.maximum(hn, 0.0)
    return conv1(hr, params['W2'], params['b2'])


if __name__ == "__main__":
    B, D, H = 2, 32, 4        # feature_dim=32, num_heads=4
    N, M = 8, 8               # sequence lengths of x and source

    key = jax.random.PRNGKey(0)
    kx, ks, kp = jax.random.split(key, 3)
    x = jax.random.normal(kx, (B, D, N), jnp.float32)
    source = jax.random.normal(ks, (B, D, M), jnp.float32)
    params = make_params(kp, D)
    prepped = prepare_params(params, H)

    out = attentional_propagation(x, source, prepped, H)
    out = jax.block_until_ready(out)

    ref = ref_forward(x, source, params, H)
    assert out.shape == (B, D, N)
    # bf16 matmul operands (f32 accumulation) + approx softmax reciprocal =>
    # tolerance loosened vs the pure-f32 reference.
    assert jnp.allclose(out, ref, atol=5e-2, rtol=5e-2), "mismatch vs reference"

    print("KERNEL_OK")
</pallas_src>

<mosaic_0001>
module attributes {stable_mosaic.version = 11 : i64} {
  func.func @_attn_mlp1_kernel(%arg0: i32, %arg1: i32, %arg2: memref<1x8x32xf32, #tpu.memory_space<vmem>>, %arg3: memref<1x8x32xf32, #tpu.memory_space<vmem>>, %arg4: memref<32x32xbf16, #tpu.memory_space<vmem>>, %arg5: memref<1x32xf32, #tpu.memory_space<vmem>>, %arg6: memref<32x64xbf16, #tpu.memory_space<vmem>>, %arg7: memref<1x64xf32, #tpu.memory_space<vmem>>, %arg8: memref<32x32xbf16, #tpu.memory_space<vmem>>, %arg9: memref<1x32xf32, #tpu.memory_space<vmem>>, %arg10: memref<32x64xbf16, #tpu.memory_space<vmem>>, %arg11: memref<32x64xbf16, #tpu.memory_space<vmem>>, %arg12: memref<1x64xf32, #tpu.memory_space<vmem>>, %arg13: memref<1x8x64xf32, #tpu.memory_space<vmem>>, %arg14: memref<1x8x64xf32, #tpu.memory_space<vmem>>, %arg15: memref<8x64xbf16, #tpu.memory_space<vmem>>) attributes {dimension_semantics = [#tpu.dimension_semantics<parallel>, #tpu.dimension_semantics<arbitrary>], iteration_bounds = array<i64: 2, 1>, scalar_prefetch = 0 : i64, scratch_operands = 1 : i64, tpu.core_type = #tpu.core_type<tc>, window_params = [{transform_indices = @transform_0, window_bounds = array<i64: 1, 8, 32>}, {transform_indices = @transform_1, window_bounds = array<i64: 1, 8, 32>}, {pipeline_mode = #tpu.pipeline_mode<synchronous>, transform_indices = @transform_2, window_bounds = array<i64: 32, 32>}, {pipeline_mode = #tpu.pipeline_mode<synchronous>, transform_indices = @transform_3, window_bounds = array<i64: 1, 32>}, {pipeline_mode = #tpu.pipeline_mode<synchronous>, transform_indices = @transform_4, window_bounds = array<i64: 32, 64>}, {pipeline_mode = #tpu.pipeline_mode<synchronous>, transform_indices = @transform_5, window_bounds = array<i64: 1, 64>}, {pipeline_mode = #tpu.pipeline_mode<synchronous>, transform_indices = @transform_6, window_bounds = array<i64: 32, 32>}, {pipeline_mode = #tpu.pipeline_mode<synchronous>, transform_indices = @transform_7, window_bounds = array<i64: 1, 32>}, {pipeline_mode = #tpu.pipeline_mode<synchronous>, transform_indices = @transform_8, window_bounds = array<i64: 32, 64>}, {pipeline_mode = #tpu.pipeline_mode<synchronous>, transform_indices = @transform_9, window_bounds = array<i64: 32, 64>}, {pipeline_mode = #tpu.pipeline_mode<synchronous>, transform_indices = @transform_10, window_bounds = array<i64: 1, 64>}, {transform_indices = @transform_11, window_bounds = array<i64: 1, 8, 64>}, {transform_indices = @transform_12, window_bounds = array<i64: 1, 8, 64>}]} {
    %c0_i32 = arith.constant 0 : i32
    %0 = arith.cmpi eq, %arg1, %c0_i32 : i32
    %1 = arith.extui %0 : i1 to i32
    %c0_i32_0 = arith.constant 0 : i32
    %2 = arith.cmpi ne, %1, %c0_i32_0 : i32
    scf.if %2 {
      %c0_58 = arith.constant 0 : index
      %c0_59 = arith.constant 0 : index
      %c0_60 = arith.constant 0 : index
      %121 = vector.load %arg3[%c0_58, %c0_59, %c0_60] : memref<1x8x32xf32, #tpu.memory_space<vmem>>, vector<1x8x32xf32>
      %122 = vector.shape_cast %121 : vector<1x8x32xf32> to vector<8x32xf32>
      %123 = arith.truncf %122 : vector<8x32xf32> to vector<8x32xbf16>
      %c0_61 = arith.constant 0 : index
      %c0_62 = arith.constant 0 : index
      %124 = vector.load %arg6[%c0_61, %c0_62] : memref<32x64xbf16, #tpu.memory_space<vmem>>, vector<32x64xbf16>
      %cst_63 = arith.constant dense<0.000000e+00> : vector<8x64xf32>
      %125 = tpu.matmul %123, %124, %cst_63 {dimension_numbers = #tpu.dot_dimension_numbers<[1], [0], [0], [1], [0, 0, 1, 1], [], []>} : vector<8x32xbf16>, vector<32x64xbf16>, vector<8x64xf32> -> vector<8x64xf32>
      %c0_64 = arith.constant 0 : index
      %c0_65 = arith.constant 0 : index
      %126 = vector.load %arg7[%c0_64, %c0_65] : memref<1x64xf32, #tpu.memory_space<vmem>>, vector<1x64xf32>
      %127 = vector.broadcast %126 : vector<1x64xf32> to vector<8x64xf32>
      %128 = arith.addf %125, %127 : vector<8x64xf32>
      %129 = arith.truncf %128 : vector<8x64xf32> to vector<8x64xbf16>
      %c0_66 = arith.constant 0 : index
      %c0_67 = arith.constant 0 : index
      %130 = vector.load %arg15[%c0_66, %c0_67] : memref<8x64xbf16, #tpu.memory_space<vmem>>, vector<8x64xbf16>
      tpu.vector_store %arg15[%c0_66, %c0_67], %129 {strides = array<i32>} : memref<8x64xbf16, #tpu.memory_space<vmem>>, vector<8x64xbf16>,
      %cst_68 = arith.constant 0.000000e+00 : f32
      %131 = vector.broadcast %cst_68 : f32 to vector<1x8x64xf32>
      %c0_69 = arith.constant 0 : index
      %c0_70 = arith.constant 0 : index
      %c0_71 = arith.constant 0 : index
      %132 = vector.load %arg14[%c0_69, %c0_70, %c0_71] : memref<1x8x64xf32, #tpu.memory_space<vmem>>, vector<1x8x64xf32>
      tpu.vector_store %arg14[%c0_69, %c0_70, %c0_71], %131 {strides = array<i32>} : memref<1x8x64xf32, #tpu.memory_space<vmem>>, vector<1x8x64xf32>,
    } else {
    }
    %c0 = arith.constant 0 : index
    %c0_1 = arith.constant 0 : index
    %c0_2 = arith.constant 0 : index
    %3 = vector.load %arg2[%c0, %c0_1, %c0_2] : memref<1x8x32xf32, #tpu.memory_space<vmem>>, vector<1x8x32xf32>
    %4 = vector.shape_cast %3 : vector<1x8x32xf32> to vector<8x32xf32>
    %5 = arith.truncf %4 : vector<8x32xf32> to vector<8x32xbf16>
    %c0_3 = arith.constant 0 : index
    %c0_4 = arith.constant 0 : index
    %6 = vector.load %arg4[%c0_3, %c0_4] : memref<32x32xbf16, #tpu.memory_space<vmem>>, vector<32x32xbf16>
    %cst = arith.constant dense<0.000000e+00> : vector<8x32xf32>
    %7 = tpu.matmul %5, %6, %cst {dimension_numbers = #tpu.dot_dimension_numbers<[1], [0], [0], [1], [0, 0, 1, 1], [], []>} : vector<8x32xbf16>, vector<32x32xbf16>, vector<8x32xf32> -> vector<8x32xf32>
    %c0_5 = arith.constant 0 : index
    %c0_6 = arith.constant 0 : index
    %8 = vector.load %arg5[%c0_5, %c0_6] : memref<1x32xf32, #tpu.memory_space<vmem>>, vector<1x32xf32>
    %9 = vector.broadcast %8 : vector<1x32xf32> to vector<8x32xf32>
    %10 = arith.addf %7, %9 : vector<8x32xf32>
    %11 = arith.truncf %10 : vector<8x32xf32> to vector<8x32xbf16>
    %c0_7 = arith.constant 0 : index
    %c0_8 = arith.constant 0 : index
    %12 = vector.load %arg15[%c0_7, %c0_8] : memref<8x64xbf16, #tpu.memory_space<vmem>>, vector<8x64xbf16>
    %13 = vector.extract_strided_slice %11 {offsets = [0, 0], sizes = [8, 8], strides = [1, 1]} : vector<8x32xbf16> to vector<8x8xbf16>
    %14 = vector.extract_strided_slice %12 {offsets = [0, 0], sizes = [8, 8], strides = [1, 1]} : vector<8x64xbf16> to vector<8x8xbf16>
    %15 = vector.extract_strided_slice %12 {offsets = [0, 32], sizes = [8, 8], strides = [1, 1]} : vector<8x64xbf16> to vector<8x8xbf16>
    %cst_9 = arith.constant dense<0.000000e+00> : vector<8x8xf32>
    %16 = tpu.matmul %13, %14, %cst_9 {dimension_numbers = #tpu.dot_dimension_numbers<[1], [1], [0], [0], [0, 0, 1, 0], [], []>} : vector<8x8xbf16>, vector<8x8xbf16>, vector<8x8xf32> -> vector<8x8xf32>
    %cst_10 = arith.constant 0.353553385 : f32
    %17 = vector.broadcast %cst_10 : f32 to vector<8x8xf32>
    %18 = arith.mulf %16, %17 : vector<8x8xf32>
    %cst_11 = arith.constant dense<0xFF800000> : vector<8xf32>
    %19 = vector.multi_reduction <maximumf>, %18, %cst_11 [1] : vector<8x8xf32> to vector<8xf32>
    %20 = vector.shape_cast %19 : vector<8xf32> to vector<8x1xf32>
    %21 = vector.broadcast %20 : vector<8x1xf32> to vector<8x8xf32>
    %22 = arith.subf %18, %21 : vector<8x8xf32>
    %23 = math.exp %22 : vector<8x8xf32>
    %cst_12 = arith.constant dense<0.000000e+00> : vector<8xf32>
    %24 = vector.multi_reduction <add>, %23, %cst_12 [1] : vector<8x8xf32> to vector<8xf32>
    %25 = vector.shape_cast %24 : vector<8xf32> to vector<8x1xf32>
    %26 = tpu.reciprocal %25 {approx = true} : vector<8x1xf32> -> vector<8x1xf32>
    %27 = vector.broadcast %26 : vector<8x1xf32> to vector<8x8xf32>
    %28 = arith.mulf %23, %27 : vector<8x8xf32>
    %29 = arith.truncf %28 : vector<8x8xf32> to vector<8x8xbf16>
    %cst_13 = arith.constant dense<0.000000e+00> : vector<8x8xf32>
    %30 = tpu.matmul %29, %15, %cst_13 {dimension_numbers = #tpu.dot_dimension_numbers<[1], [0], [0], [1], [0, 0, 1, 1], [], []>} : vector<8x8xbf16>, vector<8x8xbf16>, vector<8x8xf32> -> vector<8x8xf32>
    %31 = vector.extract_strided_slice %11 {offsets = [0, 8], sizes = [8, 8], strides = [1, 1]} : vector<8x32xbf16> to vector<8x8xbf16>
    %32 = vector.extract_strided_slice %12 {offsets = [0, 8], sizes = [8, 8], strides = [1, 1]} : vector<8x64xbf16> to vector<8x8xbf16>
    %33 = vector.extract_strided_slice %12 {offsets = [0, 40], sizes = [8, 8], strides = [1, 1]} : vector<8x64xbf16> to vector<8x8xbf16>
    %cst_14 = arith.constant dense<0.000000e+00> : vector<8x8xf32>
    %34 = tpu.matmul %31, %32, %cst_14 {dimension_numbers = #tpu.dot_dimension_numbers<[1], [1], [0], [0], [0, 0, 1, 0], [], []>} : vector<8x8xbf16>, vector<8x8xbf16>, vector<8x8xf32> -> vector<8x8xf32>
    %cst_15 = arith.constant 0.353553385 : f32
    %35 = vector.broadcast %cst_15 : f32 to vector<8x8xf32>
    %36 = arith.mulf %34, %35 : vector<8x8xf32>
    %cst_16 = arith.constant dense<0xFF800000> : vector<8xf32>
    %37 = vector.multi_reduction <maximumf>, %36, %cst_16 [1] : vector<8x8xf32> to vector<8xf32>
    %38 = vector.shape_cast %37 : vector<8xf32> to vector<8x1xf32>
    %39 = vector.broadcast %38 : vector<8x1xf32> to vector<8x8xf32>
    %40 = arith.subf %36, %39 : vector<8x8xf32>
    %41 = math.exp %40 : vector<8x8xf32>
    %cst_17 = arith.constant dense<0.000000e+00> : vector<8xf32>
    %42 = vector.multi_reduction <add>, %41, %cst_17 [1] : vector<8x8xf32> to vector<8xf32>
    %43 = vector.shape_cast %42 : vector<8xf32> to vector<8x1xf32>
    %44 = tpu.reciprocal %43 {approx = true} : vector<8x1xf32> -> vector<8x1xf32>
    %45 = vector.broadcast %44 : vector<8x1xf32> to vector<8x8xf32>
    %46 = arith.mulf %41, %45 : vector<8x8xf32>
    %47 = arith.truncf %46 : vector<8x8xf32> to vector<8x8xbf16>
    %cst_18 = arith.constant dense<0.000000e+00> : vector<8x8xf32>
    %48 = tpu.matmul %47, %33, %cst_18 {dimension_numbers = #tpu.dot_dimension_numbers<[1], [0], [0], [1], [0, 0, 1, 1], [], []>} : vector<8x8xbf16>, vector<8x8xbf16>, vector<8x8xf32> -> vector<8x8xf32>
    %49 = vector.extract_strided_slice %11 {offsets = [0, 16], sizes = [8, 8], strides = [1, 1]} : vector<8x32xbf16> to vector<8x8xbf16>
    %50 = vector.extract_strided_slice %12 {offsets = [0, 16], sizes = [8, 8], strides = [1, 1]} : vector<8x64xbf16> to vector<8x8xbf16>
    %51 = vector.extract_strided_slice %12 {offsets = [0, 48], sizes = [8, 8], strides = [1, 1]} : vector<8x64xbf16> to vector<8x8xbf16>
    %cst_19 = arith.constant dense<0.000000e+00> : vector<8x8xf32>
    %52 = tpu.matmul %49, %50, %cst_19 {dimension_numbers = #tpu.dot_dimension_numbers<[1], [1], [0], [0], [0, 0, 1, 0], [], []>} : vector<8x8xbf16>, vector<8x8xbf16>, vector<8x8xf32> -> vector<8x8xf32>
    %cst_20 = arith.constant 0.353553385 : f32
    %53 = vector.broadcast %cst_20 : f32 to vector<8x8xf32>
    %54 = arith.mulf %52, %53 : vector<8x8xf32>
    %cst_21 = arith.constant dense<0xFF800000> : vector<8xf32>
    %55 = vector.multi_reduction <maximumf>, %54, %cst_21 [1] : vector<8x8xf32> to vector<8xf32>
    %56 = vector.shape_cast %55 : vector<8xf32> to vector<8x1xf32>
    %57 = vector.broadcast %56 : vector<8x1xf32> to vector<8x8xf32>
    %58 = arith.subf %54, %57 : vector<8x8xf32>
    %59 = math.exp %58 : vector<8x8xf32>
    %cst_22 = arith.constant dense<0.000000e+00> : vector<8xf32>
    %60 = vector.multi_reduction <add>, %59, %cst_22 [1] : vector<8x8xf32> to vector<8xf32>
    %61 = vector.shape_cast %60 : vector<8xf32> to vector<8x1xf32>
    %62 = tpu.reciprocal %61 {approx = true} : vector<8x1xf32> -> vector<8x1xf32>
    %63 = vector.broadcast %62 : vector<8x1xf32> to vector<8x8xf32>
    %64 = arith.mulf %59, %63 : vector<8x8xf32>
    %65 = arith.truncf %64 : vector<8x8xf32> to vector<8x8xbf16>
    %cst_23 = arith.constant dense<0.000000e+00> : vector<8x8xf32>
    %66 = tpu.matmul %65, %51, %cst_23 {dimension_numbers = #tpu.dot_dimension_numbers<[1], [0], [0], [1], [0, 0, 1, 1], [], []>} : vector<8x8xbf16>, vector<8x8xbf16>, vector<8x8xf32> -> vector<8x8xf32>
    %67 = vector.extract_strided_slice %11 {offsets = [0, 24], sizes = [8, 8], strides = [1, 1]} : vector<8x32xbf16> to vector<8x8xbf16>
    %68 = vector.extract_strided_slice %12 {offsets = [0, 24], sizes = [8, 8], strides = [1, 1]} : vector<8x64xbf16> to vector<8x8xbf16>
    %69 = vector.extract_strided_slice %12 {offsets = [0, 56], sizes = [8, 8], strides = [1, 1]} : vector<8x64xbf16> to vector<8x8xbf16>
    %cst_24 = arith.constant dense<0.000000e+00> : vector<8x8xf32>
    %70 = tpu.matmul %67, %68, %cst_24 {dimension_numbers = #tpu.dot_dimension_numbers<[1], [1], [0], [0], [0, 0, 1, 0], [], []>} : vector<8x8xbf16>, vector<8x8xbf16>, vector<8x8xf32> -> vector<8x8xf32>
    %cst_25 = arith.constant 0.353553385 : f32
    %71 = vector.broadcast %cst_25 : f32 to vector<8x8xf32>
    %72 = arith.mulf %70, %71 : vector<8x8xf32>
    %cst_26 = arith.constant dense<0xFF800000> : vector<8xf32>
    %73 = vector.multi_reduction <maximumf>, %72, %cst_26 [1] : vector<8x8xf32> to vector<8xf32>
    %74 = vector.shape_cast %73 : vector<8xf32> to vector<8x1xf32>
    %75 = vector.broadcast %74 : vector<8x1xf32> to vector<8x8xf32>
    %76 = arith.subf %72, %75 : vector<8x8xf32>
    %77 = math.exp %76 : vector<8x8xf32>
    %cst_27 = arith.constant dense<0.000000e+00> : vector<8xf32>
    %78 = vector.multi_reduction <add>, %77, %cst_27 [1] : vector<8x8xf32> to vector<8xf32>
    %79 = vector.shape_cast %78 : vector<8xf32> to vector<8x1xf32>
    %80 = tpu.reciprocal %79 {approx = true} : vector<8x1xf32> -> vector<8x1xf32>
    %81 = vector.broadcast %80 : vector<8x1xf32> to vector<8x8xf32>
    %82 = arith.mulf %77, %81 : vector<8x8xf32>
    %83 = arith.truncf %82 : vector<8x8xf32> to vector<8x8xbf16>
    %cst_28 = arith.constant dense<0.000000e+00> : vector<8x8xf32>
    %84 = tpu.matmul %83, %69, %cst_28 {dimension_numbers = #tpu.dot_dimension_numbers<[1], [0], [0], [1], [0, 0, 1, 1], [], []>} : vector<8x8xbf16>, vector<8x8xbf16>, vector<8x8xf32> -> vector<8x8xf32>
    %85 = tpu.concatenate %30, %48, %66, %84 in 1 : vector<8x8xf32>, vector<8x8xf32>, vector<8x8xf32>, vector<8x8xf32> -> vector<8x32xf32>
    %86 = arith.truncf %85 : vector<8x32xf32> to vector<8x32xbf16>
    %c0_29 = arith.constant 0 : index
    %c0_30 = arith.constant 0 : index
    %87 = vector.load %arg8[%c0_29, %c0_30] : memref<32x32xbf16, #tpu.memory_space<vmem>>, vector<32x32xbf16>
    %cst_31 = arith.constant dense<0.000000e+00> : vector<8x32xf32>
    %88 = tpu.matmul %86, %87, %cst_31 {dimension_numbers = #tpu.dot_dimension_numbers<[1], [0], [0], [1], [0, 0, 1, 1], [], []>} : vector<8x32xbf16>, vector<32x32xbf16>, vector<8x32xf32> -> vector<8x32xf32>
    %c0_32 = arith.constant 0 : index
    %c0_33 = arith.constant 0 : index
    %89 = vector.load %arg9[%c0_32, %c0_33] : memref<1x32xf32, #tpu.memory_space<vmem>>, vector<1x32xf32>
    %90 = vector.broadcast %89 : vector<1x32xf32> to vector<8x32xf32>
    %91 = arith.addf %88, %90 : vector<8x32xf32>
    %c0_34 = arith.constant 0 : index
    %c0_35 = arith.constant 0 : index
    %92 = vector.load %arg10[%c0_34, %c0_35] : memref<32x64xbf16, #tpu.memory_space<vmem>>, vector<32x64xbf16>
    %cst_36 = arith.constant dense<0.000000e+00> : vector<8x64xf32>
    %93 = tpu.matmul %5, %92, %cst_36 {dimension_numbers = #tpu.dot_dimension_numbers<[1], [0], [0], [1], [0, 0, 1, 1], [], []>} : vector<8x32xbf16>, vector<32x64xbf16>, vector<8x64xf32> -> vector<8x64xf32>
    %94 = arith.truncf %91 : vector<8x32xf32> to vector<8x32xbf16>
    %c0_37 = arith.constant 0 : index
    %c0_38 = arith.constant 0 : index
    %95 = vector.load %arg11[%c0_37, %c0_38] : memref<32x64xbf16, #tpu.memory_space<vmem>>, vector<32x64xbf16>
    %cst_39 = arith.constant dense<0.000000e+00> : vector<8x64xf32>
    %96 = tpu.matmul %94, %95, %cst_39 {dimension_numbers = #tpu.dot_dimension_numbers<[1], [0], [0], [1], [0, 0, 1, 1], [], []>} : vector<8x32xbf16>, vector<32x64xbf16>, vector<8x64xf32> -> vector<8x64xf32>
    %97 = arith.addf %93, %96 : vector<8x64xf32>
    %c0_40 = arith.constant 0 : index
    %c0_41 = arith.constant 0 : index
    %98 = vector.load %arg12[%c0_40, %c0_41] : memref<1x64xf32, #tpu.memory_space<vmem>>, vector<1x64xf32>
    %99 = vector.broadcast %98 : vector<1x64xf32> to vector<8x64xf32>
    %100 = arith.addf %97, %99 : vector<8x64xf32>
    %c0_42 = arith.constant 0 : index
    %c0_43 = arith.constant 0 : index
    %c0_44 = arith.constant 0 : index
    %101 = vector.load %arg13[%c0_42, %c0_43, %c0_44] : memref<1x8x64xf32, #tpu.memory_space<vmem>>, vector<1x8x64xf32>
    %102 = vector.shape_cast %101 : vector<1x8x64xf32> to vector<8x64xf32>
    %103 = vector.shape_cast %100 : vector<8x64xf32> to vector<1x8x64xf32>
    tpu.vector_store %arg13[%c0_42, %c0_43, %c0_44], %103 {strides = array<i32>} : memref<1x8x64xf32, #tpu.memory_space<vmem>>, vector<1x8x64xf32>,
    %c0_45 = arith.constant 0 : index
    %c0_46 = arith.constant 0 : index
    %c0_47 = arith.constant 0 : index
    %104 = vector.load %arg14[%c0_45, %c0_46, %c0_47] : memref<1x8x64xf32, #tpu.memory_space<vmem>>, vector<1x1x64xf32>
    %105 = vector.shape_cast %104 : vector<1x1x64xf32> to vector<1x64xf32>
    %cst_48 = arith.constant dense<0.000000e+00> : vector<64xf32>
    %106 = vector.multi_reduction <add>, %100, %cst_48 [0] : vector<8x64xf32> to vector<64xf32>
    %107 = vector.shape_cast %106 : vector<64xf32> to vector<1x64xf32>
    %108 = arith.addf %105, %107 : vector<1x64xf32>
    %c0_49 = arith.constant 0 : index
    %c0_50 = arith.constant 0 : index
    %c0_51 = arith.constant 0 : index
    %109 = vector.load %arg14[%c0_49, %c0_50, %c0_51] : memref<1x8x64xf32, #tpu.memory_space<vmem>>, vector<1x1x64xf32>
    %110 = vector.shape_cast %109 : vector<1x1x64xf32> to vector<1x64xf32>
    %111 = vector.shape_cast %108 : vector<1x64xf32> to vector<1x1x64xf32>
    tpu.vector_store %arg14[%c0_49, %c0_50, %c0_51], %111 {strides = array<i32>} : memref<1x8x64xf32, #tpu.memory_space<vmem>>, vector<1x1x64xf32>,
    %c0_52 = arith.constant 0 : index
    %c1 = arith.constant 1 : index
    %c0_53 = arith.constant 0 : index
    %112 = vector.load %arg14[%c0_52, %c1, %c0_53] : memref<1x8x64xf32, #tpu.memory_space<vmem>>, vector<1x1x64xf32>
    %113 = vector.shape_cast %112 : vector<1x1x64xf32> to vector<1x64xf32>
    %114 = arith.mulf %100, %100 : vector<8x64xf32>
    %cst_54 = arith.constant dense<0.000000e+00> : vector<64xf32>
    %115 = vector.multi_reduction <add>, %114, %cst_54 [0] : vector<8x64xf32> to vector<64xf32>
    %116 = vector.shape_cast %115 : vector<64xf32> to vector<1x64xf32>
    %117 = arith.addf %113, %116 : vector<1x64xf32>
    %c0_55 = arith.constant 0 : index
    %c1_56 = arith.constant 1 : index
    %c0_57 = arith.constant 0 : index
    %118 = vector.load %arg14[%c0_55, %c1_56, %c0_57] : memref<1x8x64xf32, #tpu.memory_space<vmem>>, vector<1x1x64xf32>
    %119 = vector.shape_cast %118 : vector<1x1x64xf32> to vector<1x64xf32>
    %120 = vector.shape_cast %117 : vector<1x64xf32> to vector<1x1x64xf32>
    tpu.vector_store %arg14[%c0_55, %c1_56, %c0_57], %120 {strides = array<i32>} : memref<1x8x64xf32, #tpu.memory_space<vmem>>, vector<1x1x64xf32>,
    return
  }
  func.func @transform_0(%arg0: i32, %arg1: i32) -> (i32, i32, i32) {
    %c0_i32 = arith.constant 0 : i32
    %c0_i32_0 = arith.constant 0 : i32
    return %arg0, %arg1, %c0_i32 : i32, i32, i32
  }
  func.func @transform_1(%arg0: i32, %arg1: i32) -> (i32, i32, i32) {
    %c0_i32 = arith.constant 0 : i32
    %c0_i32_0 = arith.constant 0 : i32
    %c0_i32_1 = arith.constant 0 : i32
    return %arg0, %c0_i32, %c0_i32_0 : i32, i32, i32
  }
  func.func @transform_2(%arg0: i32, %arg1: i32) -> (i32, i32) {
    %c0_i32 = arith.constant 0 : i32
    %c0_i32_0 = arith.constant 0 : i32
    %c0_i32_1 = arith.constant 0 : i32
    return %c0_i32, %c0_i32_0 : i32, i32
  }
  func.func @transform_3(%arg0: i32, %arg1: i32) -> (i32, i32) {
    %c0_i32 = arith.constant 0 : i32
    %c0_i32_0 = arith.constant 0 : i32
    %c0_i32_1 = arith.constant 0 : i32
    return %c0_i32, %c0_i32_0 : i32, i32
  }
  func.func @transform_4(%arg0: i32, %arg1: i32) -> (i32, i32) {
    %c0_i32 = arith.constant 0 : i32
    %c0_i32_0 = arith.constant 0 : i32
    %c0_i32_1 = arith.constant 0 : i32
    return %c0_i32, %c0_i32_0 : i32, i32
  }
  func.func @transform_5(%arg0: i32, %arg1: i32) -> (i32, i32) {
    %c0_i32 = arith.constant 0 : i32
    %c0_i32_0 = arith.constant 0 : i32
    %c0_i32_1 = arith.constant 0 : i32
    return %c0_i32, %c0_i32_0 : i32, i32
  }
  func.func @transform_6(%arg0: i32, %arg1: i32) -> (i32, i32) {
    %c0_i32 = arith.constant 0 : i32
    %c0_i32_0 = arith.constant 0 : i32
    %c0_i32_1 = arith.constant 0 : i32
    return %c0_i32, %c0_i32_0 : i32, i32
  }
  func.func @transform_7(%arg0: i32, %arg1: i32) -> (i32, i32) {
    %c0_i32 = arith.constant 0 : i32
    %c0_i32_0 = arith.constant 0 : i32
    %c0_i32_1 = arith.constant 0 : i32
    return %c0_i32, %c0_i32_0 : i32, i32
  }
  func.func @transform_8(%arg0: i32, %arg1: i32) -> (i32, i32) {
    %c0_i32 = arith.constant 0 : i32
    %c0_i32_0 = arith.constant 0 : i32
    %c0_i32_1 = arith.constant 0 : i32
    return %c0_i32, %c0_i32_0 : i32, i32
  }
  func.func @transform_9(%arg0: i32, %arg1: i32) -> (i32, i32) {
    %c0_i32 = arith.constant 0 : i32
    %c0_i32_0 = arith.constant 0 : i32
    %c0_i32_1 = arith.constant 0 : i32
    return %c0_i32, %c0_i32_0 : i32, i32
  }
  func.func @transform_10(%arg0: i32, %arg1: i32) -> (i32, i32) {
    %c0_i32 = arith.constant 0 : i32
    %c0_i32_0 = arith.constant 0 : i32
    %c0_i32_1 = arith.constant 0 : i32
    return %c0_i32, %c0_i32_0 : i32, i32
  }
  func.func @transform_11(%arg0: i32, %arg1: i32) -> (i32, i32, i32) {
    %c0_i32 = arith.constant 0 : i32
    %c0_i32_0 = arith.constant 0 : i32
    return %arg0, %arg1, %c0_i32 : i32, i32, i32
  }
  func.func @transform_12(%arg0: i32, %arg1: i32) -> (i32, i32, i32) {
    %c0_i32 = arith.constant 0 : i32
    %c0_i32_0 = arith.constant 0 : i32
    %c0_i32_1 = arith.constant 0 : i32
    return %arg0, %c0_i32, %c0_i32_0 : i32, i32, i32
  }
}

</mosaic_0001>

<llo_original>
// kernel: tpu_custom_call.1
$region0: #{tpu_custom_call.1}
  #allocation0 [shape = 'u32[]', space=smem, size = 0x4, offset = 0x4, fixed_abs, tag = 'smem constant byte address 0x4 - core index']
  #allocation1 [shape = 'u32[144,128]{1,0:T(1,128)}', space=vmem, size = 0x12000, scoped, tag = 'internal scratch']
  #allocation2 [shape = 'bf16[8,64]{1,0:T(8,128)(2,1)}', space=vmem, size = 0x800, scoped, tag = 'scratch operand']
  %s0 = inlined_call_operand.hbm [shape: f32[2,8,32], index: 0, kind: input, shape index: {}]
  %s1 = inlined_call_operand.hbm [shape: f32[2,8,32], index: 1, kind: input, shape index: {}]
  %s2 = inlined_call_operand.hbm [shape: bf16[32,32], index: 2, kind: input, shape index: {}]
  %s3 = inlined_call_operand.vmem [shape: f32[1,32], index: 3, kind: input, shape index: {}]
  %s4 = inlined_call_operand.hbm [shape: bf16[32,64], index: 4, kind: input, shape index: {}]
  %s5 = inlined_call_operand.vmem [shape: f32[1,64], index: 5, kind: input, shape index: {}]
  %s6 = inlined_call_operand.vmem [shape: bf16[32,32], index: 6, kind: input, shape index: {}]
  %s7 = inlined_call_operand.hbm [shape: f32[1,32], index: 7, kind: input, shape index: {}]
  %s8 = inlined_call_operand.hbm [shape: bf16[32,64], index: 8, kind: input, shape index: {}]
  %s9 = inlined_call_operand.vmem [shape: bf16[32,64], index: 9, kind: input, shape index: {}]
  %s10 = inlined_call_operand.vmem [shape: f32[1,64], index: 10, kind: input, shape index: {}]
  %s11 = inlined_call_operand.hbm [shape: f32[2,8,64], index: 11, kind: output, shape index: {0}]
  %s12 = inlined_call_operand.hbm [shape: f32[2,8,64], index: 12, kind: output, shape index: {1}]
  %13 = xla_tuple %s11, %s12
  %s14 = sld [smem:[#allocation0]]
  $region113: #{tpu_custom_call.1} parent=0
    _
  %s16 = ssub.s32 1, %s14
  %s17 = scalar_select 0, %s16, %s14
  $region1: #{tpu_custom_call.1} parent=0
    #allocation3 [shape = 'u8[8192]{0}', space=vmem, size = 0x2000, scoped, tag = 'input window, operand 0']
    #allocation4 [shape = 's32[2]{0}', space=sflag, size = 0x8, scoped, tag = 'scoped memory for tpu_custom_call.1']
    #allocation5 [shape = 's32[2]{0}', space=sflag, size = 0x8, scoped, tag = 'scoped memory for tpu_custom_call.1']
    #allocation6 [shape = 'u8[8192]{0}', space=vmem, size = 0x2000, scoped, tag = 'input window, operand 1']
    #allocation7 [shape = 's32[2]{0}', space=sflag, size = 0x8, scoped, tag = 'scoped memory for tpu_custom_call.1']
    #allocation8 [shape = 'u8[8192]{0}', space=vmem, size = 0x2000, scoped, tag = 'input window, operand 2, single buffered']
    #allocation9 [shape = 'u8[8192]{0}', space=vmem, size = 0x2000, scoped, tag = 'input window, operand 4, single buffered']
    #allocation10 [shape = 's32[1]{0}', space=sflag, size = 0x4, scoped, tag = 'scoped memory for tpu_custom_call.1']
    #allocation11 [shape = 'u8[512]{0}', space=vmem, size = 0x400, scoped, tag = 'input window, operand 7, single buffered']
    #allocation12 [shape = 'u8[8192]{0}', space=vmem, size = 0x2000, scoped, tag = 'input window, operand 8, single buffered']
    #allocation13 [shape = 's32[1]{0}', space=sflag, size = 0x4, scoped, tag = 'scoped memory for tpu_custom_call.1']
    #allocation14 [shape = 'u8[8192]{0}', space=vmem, size = 0x2000, scoped, tag = 'output window, operand 0']
    #allocation15 [shape = 'u8[8192]{0}', space=vmem, size = 0x2000, scoped, tag = 'output window, operand 1']
    #allocation16 [shape = 's32[2]{0}', space=sflag, size = 0x8, scoped, tag = 'scoped memory for tpu_custom_call.1']
    %18 = vsyncpa [#allocation4], 0
    %s19 = scalar_lea.sflag [#allocation4], 1
    %20 = vsyncpa %s19, 0
    %21 = vsyncpa [#allocation7], 0
    %s22 = scalar_lea.sflag [#allocation7], 1
    %23 = vsyncpa %s22, 0
    %24 = vsyncpa [#allocation10], 0
    %25 = vsyncpa [#allocation13], 0
    %26 = vsyncpa [#allocation5], 0
    %s27 = scalar_lea.sflag [#allocation5], 1
    %28 = vsyncpa %s27, 0
    %29 = vsyncpa [#allocation16], 0
    %s30 = scalar_lea.sflag [#allocation16], 1
    %31 = vsyncpa %s30, 0
    loop: start=0, step=1, limit=4
    $region2: #{tpu_custom_call.1} parent=1 // loop_pre_header
      _
    $region3: #{tpu_custom_call.1} parent=1 // loop_header
      %s33 = sphi 0, %s37
      %p34 = scmp.ge.s32.totalorder %s33, 4
      %s40 = sphi 0, %s52
      %s41 = sphi 0, %s48
      %s42 = sphi 0, %s40
      %s43 = sphi 0, %s41
      %s44 = sphi 0, %s42
      %s45 = sphi 0, %s43
      %s57 = sphi 0, %s59
      %s60 = sphi 0, %s57
      %s61 = sphi 0, %s60
      %s77 = sphi 0, %s61
      %s83 = sphi 0, %s85
      %s86 = sphi 0, %s83
      %s87 = sphi 0, %s86
      %s103 = sphi 0, %s87
      %s107 = sphi 0, %s107
      %s109 = sphi 0, %s107
      %s110 = sphi 0, %s109
      %s124 = sphi 0, %s110
      %s128 = sphi 0, %s128
      %s130 = sphi 0, %s128
      %s131 = sphi 0, %s130
      %s145 = sphi 0, %s131
      %s149 = sphi 0, %s149
      %s151 = sphi 0, %s149
      %s152 = sphi 0, %s151
      %s166 = sphi 0, %s152
      %s170 = sphi 0, %s170
      %s172 = sphi 0, %s170
      %s173 = sphi 0, %s172
      %s187 = sphi 0, %s173
      %s191 = sphi 0, %s191
      %s193 = sphi 0, %s191
      %s194 = sphi 0, %s193
      %s208 = sphi 0, %s194
      %s212 = sphi 0, %s212
      %s214 = sphi 0, %s212
      %s215 = sphi 0, %s214
      %s229 = sphi 0, %s215
      %s233 = sphi 0, %s233
      %s235 = sphi 0, %s233
      %s236 = sphi 0, %s235
      %s250 = sphi 0, %s236
      %s254 = sphi 0, %s254
      %s256 = sphi 0, %s254
      %s257 = sphi 0, %s256
      %s271 = sphi 0, %s257
      %s275 = sphi 0, %s275
      %s277 = sphi 0, %s275
      %s278 = sphi 0, %s277
      %s292 = sphi 0, %s278
      %s300 = sphi 0, %s302
      %s303 = sphi 0, %s300
      %s304 = sphi 0, %s303
      %s320 = sphi 0, %s304
      %s326 = sphi 0, %s328
      %s329 = sphi 0, %s326
      %s330 = sphi 0, %s329
      %s346 = sphi 0, %s330
    $region4: #{tpu_custom_call.1} parent=1 // loop_header_branch
      %36 = sbr.rel (%p34) target = $region8
    $region5: #{tpu_custom_call.1} parent=1 // loop_body
      %s38 = ssub.s32 %s33, 1
      %s39 = ssub.s32 %s33, 2
      %s46 = sadd.s32 1, %s41
      %p47 = scmp.ge.s32.totalorder %s46, 1
      %s48 = scalar_select %p47, 0, %s46
      %s49 = sadd.s32 1, %s40
      %s50 = scalar_select %p47, %s49, %s40
      %p51 = scmp.ge.s32.totalorder %s50, 2
      %s52 = scalar_select %p51, 0, %s50
      %s53 = ssub.s32 %s40, %s52
      %s54 = ssub.s32 %s41, %s48
      %s55 = sor.u32 %s53, %s54
      %p56 = scmp.eq.s32.totalorder %s55, 0
      %s58 = sadd.s32 %s57, 1
      %s59 = scalar_select %p56, %s57, %s58
      %p62 = pneg %p56
      %p63 = scmp.eq.s32.totalorder %s33, 1
      %p64 = por %p62, %p63
      %p65 = scmp.ne.s32.totalorder %s57, %s60
      %p66 = scmp.eq.s32.totalorder %s33, 0
      %p67 = por %p65, %p66
      %p68 = scmp.ne.s32.totalorder %s57, %s60
      %p69 = scmp.eq.s32.totalorder %s38, 1
      %p70 = por %p68, %p69
      %p71 = scmp.ne.s32.totalorder %s60, %s61
      %p72 = scmp.eq.s32.totalorder %s38, 0
      %p73 = por %p71, %p72
      %p74 = scmp.ne.s32.totalorder %s60, %s61
      %p75 = scmp.eq.s32.totalorder %s39, 1
      %p76 = por %p74, %p75
      %p78 = scmp.ne.s32.totalorder %s61, %s77
      %p79 = scmp.eq.s32.totalorder %s39, 0
      %p80 = por %p78, %p79
      %s81 = ssub.s32 %s40, %s52
      %p82 = scmp.eq.s32.totalorder %s81, 0
      %s84 = sadd.s32 %s83, 1
      %s85 = scalar_select %p82, %s83, %s84
      %p88 = pneg %p82
      %p89 = scmp.eq.s32.totalorder %s33, 1
      %p90 = por %p88, %p89
      %p91 = scmp.ne.s32.totalorder %s83, %s86
      %p92 = scmp.eq.s32.totalorder %s33, 0
      %p93 = por %p91, %p92
      %p94 = scmp.ne.s32.totalorder %s83, %s86
      %p95 = scmp.eq.s32.totalorder %s38, 1
      %p96 = por %p94, %p95
      %p97 = scmp.ne.s32.totalorder %s86, %s87
      %p98 = scmp.eq.s32.totalorder %s38, 0
      %p99 = por %p97, %p98
      %p100 = scmp.ne.s32.totalorder %s86, %s87
      %p101 = scmp.eq.s32.totalorder %s39, 1
      %p102 = por %p100, %p101
      %p104 = scmp.ne.s32.totalorder %s87, %s103
      %p105 = scmp.eq.s32.totalorder %s39, 0
      %p106 = por %p104, %p105
      %s108 = sadd.s32 %s107, 1
      %p111 = scmp.eq.s32.totalorder %s33, 1
      %p112 = scmp.ne.s32.totalorder %s107, %s109
      %p113 = scmp.eq.s32.totalorder %s33, 0
      %p114 = por %p112, %p113
      %p115 = scmp.ne.s32.totalorder %s107, %s109
      %p116 = scmp.eq.s32.totalorder %s38, 1
      %p117 = por %p115, %p116
      %p118 = scmp.ne.s32.totalorder %s109, %s110
      %p119 = scmp.eq.s32.totalorder %s38, 0
      %p120 = por %p118, %p119
      %p121 = scmp.ne.s32.totalorder %s109, %s110
      %p122 = scmp.eq.s32.totalorder %s39, 1
      %p123 = por %p121, %p122
      %p125 = scmp.ne.s32.totalorder %s110, %s124
      %p126 = scmp.eq.s32.totalorder %s39, 0
      %p127 = por %p125, %p126
      %s129 = sadd.s32 %s128, 1
      %p132 = scmp.eq.s32.totalorder %s33, 1
      %p133 = scmp.ne.s32.totalorder %s128, %s130
      %p134 = scmp.eq.s32.totalorder %s33, 0
      %p135 = por %p133, %p134
      %p136 = scmp.ne.s32.totalorder %s128, %s130
      %p137 = scmp.eq.s32.totalorder %s38, 1
      %p138 = por %p136, %p137
      %p139 = scmp.ne.s32.totalorder %s130, %s131
      %p140 = scmp.eq.s32.totalorder %s38, 0
      %p141 = por %p139, %p140
      %p142 = scmp.ne.s32.totalorder %s130, %s131
      %p143 = scmp.eq.s32.totalorder %s39, 1
      %p144 = por %p142, %p143
      %p146 = scmp.ne.s32.totalorder %s131, %s145
      %p147 = scmp.eq.s32.totalorder %s39, 0
      %p148 = por %p146, %p147
      %s150 = sadd.s32 %s149, 1
      %p153 = scmp.eq.s32.totalorder %s33, 1
      %p154 = scmp.ne.s32.totalorder %s149, %s151
      %p155 = scmp.eq.s32.totalorder %s33, 0
      %p156 = por %p154, %p155
      %p157 = scmp.ne.s32.totalorder %s149, %s151
      %p158 = scmp.eq.s32.totalorder %s38, 1
      %p159 = por %p157, %p158
      %p160 = scmp.ne.s32.totalorder %s151, %s152
      %p161 = scmp.eq.s32.totalorder %s38, 0
      %p162 = por %p160, %p161
      %p163 = scmp.ne.s32.totalorder %s151, %s152
      %p164 = scmp.eq.s32.totalorder %s39, 1
      %p165 = por %p163, %p164
      %p167 = scmp.ne.s32.totalorder %s152, %s166
      %p168 = scmp.eq.s32.totalorder %s39, 0
      %p169 = por %p167, %p168
      %s171 = sadd.s32 %s170, 1
      %p174 = scmp.eq.s32.totalorder %s33, 1
      %p175 = scmp.ne.s32.totalorder %s170, %s172
      %p176 = scmp.eq.s32.totalorder %s33, 0
      %p177 = por %p175, %p176
      %p178 = scmp.ne.s32.totalorder %s170, %s172
      %p179 = scmp.eq.s32.totalorder %s38, 1
      %p180 = por %p178, %p179
      %p181 = scmp.ne.s32.totalorder %s172, %s173
      %p182 = scmp.eq.s32.totalorder %s38, 0
      %p183 = por %p181, %p182
      %p184 = scmp.ne.s32.totalorder %s172, %s173
      %p185 = scmp.eq.s32.totalorder %s39, 1
      %p186 = por %p184, %p185
      %p188 = scmp.ne.s32.totalorder %s173, %s187
      %p189 = scmp.eq.s32.totalorder %s39, 0
      %p190 = por %p188, %p189
      %s192 = sadd.s32 %s191, 1
      %p195 = scmp.eq.s32.totalorder %s33, 1
      %p196 = scmp.ne.s32.totalorder %s191, %s193
      %p197 = scmp.eq.s32.totalorder %s33, 0
      %p198 = por %p196, %p197
      %p199 = scmp.ne.s32.totalorder %s191, %s193
      %p200 = scmp.eq.s32.totalorder %s38, 1
      %p201 = por %p199, %p200
      %p202 = scmp.ne.s32.totalorder %s193, %s194
      %p203 = scmp.eq.s32.totalorder %s38, 0
      %p204 = por %p202, %p203
      %p205 = scmp.ne.s32.totalorder %s193, %s194
      %p206 = scmp.eq.s32.totalorder %s39, 1
      %p207 = por %p205, %p206
      %p209 = scmp.ne.s32.totalorder %s194, %s208
      %p210 = scmp.eq.s32.totalorder %s39, 0
      %p211 = por %p209, %p210
      %s213 = sadd.s32 %s212, 1
      %p216 = scmp.eq.s32.totalorder %s33, 1
      %p217 = scmp.ne.s32.totalorder %s212, %s214
      %p218 = scmp.eq.s32.totalorder %s33, 0
      %p219 = por %p217, %p218
      %p220 = scmp.ne.s32.totalorder %s212, %s214
      %p221 = scmp.eq.s32.totalorder %s38, 1
      %p222 = por %p220, %p221
      %p223 = scmp.ne.s32.totalorder %s214, %s215
      %p224 = scmp.eq.s32.totalorder %s38, 0
      %p225 = por %p223, %p224
      %p226 = scmp.ne.s32.totalorder %s214, %s215
      %p227 = scmp.eq.s32.totalorder %s39, 1
      %p228 = por %p226, %p227
      %p230 = scmp.ne.s32.totalorder %s215, %s229
      %p231 = scmp.eq.s32.totalorder %s39, 0
      %p232 = por %p230, %p231
      %s234 = sadd.s32 %s233, 1
      %p237 = scmp.eq.s32.totalorder %s33, 1
      %p238 = scmp.ne.s32.totalorder %s233, %s235
      %p239 = scmp.eq.s32.totalorder %s33, 0
      %p240 = por %p238, %p239
      %p241 = scmp.ne.s32.totalorder %s233, %s235
      %p242 = scmp.eq.s32.totalorder %s38, 1
      %p243 = por %p241, %p242
      %p244 = scmp.ne.s32.totalorder %s235, %s236
      %p245 = scmp.eq.s32.totalorder %s38, 0
      %p246 = por %p244, %p245
      %p247 = scmp.ne.s32.totalorder %s235, %s236
      %p248 = scmp.eq.s32.totalorder %s39, 1
      %p249 = por %p247, %p248
      %p251 = scmp.ne.s32.totalorder %s236, %s250
      %p252 = scmp.eq.s32.totalorder %s39, 0
      %p253 = por %p251, %p252
      %s255 = sadd.s32 %s254, 1
      %p258 = scmp.eq.s32.totalorder %s33, 1
      %p259 = scmp.ne.s32.totalorder %s254, %s256
      %p260 = scmp.eq.s32.totalorder %s33, 0
      %p261 = por %p259, %p260
      %p262 = scmp.ne.s32.totalorder %s254, %s256
      %p263 = scmp.eq.s32.totalorder %s38, 1
      %p264 = por %p262, %p263
      %p265 = scmp.ne.s32.totalorder %s256, %s257
      %p266 = scmp.eq.s32.totalorder %s38, 0
      %p267 = por %p265, %p266
      %p268 = scmp.ne.s32.totalorder %s256, %s257
      %p269 = scmp.eq.s32.totalorder %s39, 1
      %p270 = por %p268, %p269
      %p272 = scmp.ne.s32.totalorder %s257, %s271
      %p273 = scmp.eq.s32.totalorder %s39, 0
      %p274 = por %p272, %p273
      %s276 = sadd.s32 %s275, 1
      %p279 = scmp.eq.s32.totalorder %s33, 1
      %p280 = scmp.ne.s32.totalorder %s275, %s277
      %p281 = scmp.eq.s32.totalorder %s33, 0
      %p282 = por %p280, %p281
      %p283 = scmp.ne.s32.totalorder %s275, %s277
      %p284 = scmp.eq.s32.totalorder %s38, 1
      %p285 = por %p283, %p284
      %p286 = scmp.ne.s32.totalorder %s277, %s278
      %p287 = scmp.eq.s32.totalorder %s38, 0
      %p288 = por %p286, %p287
      %p289 = scmp.ne.s32.totalorder %s277, %s278
      %p290 = scmp.eq.s32.totalorder %s39, 1
      %p291 = por %p289, %p290
      %p293 = scmp.ne.s32.totalorder %s278, %s292
      %p294 = scmp.eq.s32.totalorder %s39, 0
      %p295 = por %p293, %p294
      %s296 = ssub.s32 %s40, %s52
      %s297 = ssub.s32 %s41, %s48
      %s298 = sor.u32 %s296, %s297
      %p299 = scmp.eq.s32.totalorder %s298, 0
      %s301 = sadd.s32 %s300, 1
      %s302 = scalar_select %p299, %s300, %s301
      %p305 = pneg %p299
      %p306 = scmp.eq.s32.totalorder %s33, 1
      %p307 = por %p305, %p306
      %p308 = scmp.ne.s32.totalorder %s300, %s303
      %p309 = scmp.eq.s32.totalorder %s33, 0
      %p310 = por %p308, %p309
      %p311 = scmp.ne.s32.totalorder %s300, %s303
      %p312 = scmp.eq.s32.totalorder %s38, 1
      %p313 = por %p311, %p312
      %p314 = scmp.ne.s32.totalorder %s303, %s304
      %p315 = scmp.eq.s32.totalorder %s38, 0
      %p316 = por %p314, %p315
      %p317 = scmp.ne.s32.totalorder %s303, %s304
      %p318 = scmp.eq.s32.totalorder %s39, 1
      %p319 = por %p317, %p318
      %p321 = scmp.ne.s32.totalorder %s304, %s320
      %p322 = scmp.eq.s32.totalorder %s39, 0
      %p323 = por %p321, %p322
      %s324 = ssub.s32 %s40, %s52
      %p325 = scmp.eq.s32.totalorder %s324, 0
      %s327 = sadd.s32 %s326, 1
      %s328 = scalar_select %p325, %s326, %s327
      %p331 = pneg %p325
      %p332 = scmp.eq.s32.totalorder %s33, 1
      %p333 = por %p331, %p332
      %p334 = scmp.ne.s32.totalorder %s326, %s329
      %p335 = scmp.eq.s32.totalorder %s33, 0
      %p336 = por %p334, %p335
      %p337 = scmp.ne.s32.totalorder %s326, %s329
      %p338 = scmp.eq.s32.totalorder %s38, 1
      %p339 = por %p337, %p338
      %p340 = scmp.ne.s32.totalorder %s329, %s330
      %p341 = scmp.eq.s32.totalorder %s38, 0
      %p342 = por %p340, %p341
      %p343 = scmp.ne.s32.totalorder %s329, %s330
      %p344 = scmp.eq.s32.totalorder %s39, 1
      %p345 = por %p343, %p344
      %p347 = scmp.ne.s32.totalorder %s330, %s346
      %p348 = scmp.eq.s32.totalorder %s39, 0
      %p349 = por %p347, %p348
      %p350 = scmp.le.s32.totalorder 1, %s33
      %p351 = scmp.lt.s32.totalorder %s33, 3
      %p352 = pnand %p350, %p351
      %p353 = pneg %p352
      // Predicated region
      $region9: #{tpu_custom_call.1} parent=5 // pred_check
        _
      $region10: #{tpu_custom_call.1} parent=5 // pred_check_branch
        %355 = sbr.rel (%p352) target = $region12
      $region11: #{tpu_custom_call.1} parent=5 // pred_region
        %s356 = ssub.s32 %s33, 1
        // Predicated region
        $region13: #{tpu_custom_call.1} parent=11 // pred_check
          %p357 = pneg %p120
        $region14: #{tpu_custom_call.1} parent=11 // pred_check_branch
          %359 = sbr.rel (%p357) target = $region16
        $region15: #{tpu_custom_call.1} parent=11 // pred_region
          %s361 = ssub.s32 256, 256
          %362 = vsyncadd [#allocation7], %s361
          %s363 = sshll.u32 [#allocation8], 4
          %s364 = int_to_ptr.vmem [resolvable:$true] %s363
          %369 = dma.hbm_to_vmem [thread:$0]  %s2, 256, %s364, [#allocation7], 64, 64, 4
        $region16: #{tpu_custom_call.1} parent=11 // pred_fallthru
          _
        // Predicated region
        $region17: #{tpu_custom_call.1} parent=11 // pred_check
          %p370 = pneg %p141
        $region18: #{tpu_custom_call.1} parent=11 // pred_check_branch
          %372 = sbr.rel (%p370) target = $region20
        $region19: #{tpu_custom_call.1} parent=11 // pred_region
          _
        $region20: #{tpu_custom_call.1} parent=11 // pred_fallthru
          _
        // Predicated region
        $region21: #{tpu_custom_call.1} parent=11 // pred_check
          %p373 = pneg %p162
        $region22: #{tpu_custom_call.1} parent=11 // pred_check_branch
          %375 = sbr.rel (%p373) target = $region24
        $region23: #{tpu_custom_call.1} parent=11 // pred_region
          %s377 = ssub.s32 256, 256
          %378 = vsyncadd [#allocation10], %s377
          %s379 = sshll.u32 [#allocation9], 4
          %s380 = int_to_ptr.vmem [resolvable:$true] %s379
          %385 = dma.hbm_to_vmem [thread:$0]  %s4, 256, %s380, [#allocation10], 64, 64, 4
        $region24: #{tpu_custom_call.1} parent=11 // pred_fallthru
          _
        // Predicated region
        $region25: #{tpu_custom_call.1} parent=11 // pred_check
          %p386 = pneg %p183
        $region26: #{tpu_custom_call.1} parent=11 // pred_check_branch
          %388 = sbr.rel (%p386) target = $region28
        $region27: #{tpu_custom_call.1} parent=11 // pred_region
          _
        $region28: #{tpu_custom_call.1} parent=11 // pred_fallthru
          _
        // Predicated region
        $region29: #{tpu_custom_call.1} parent=11 // pred_check
          %p389 = pneg %p204
        $region30: #{tpu_custom_call.1} parent=11 // pred_check_branch
          %391 = sbr.rel (%p389) target = $region32
        $region31: #{tpu_custom_call.1} parent=11 // pred_region
          _
        $region32: #{tpu_custom_call.1} parent=11 // pred_fallthru
          _
        // Predicated region
        $region33: #{tpu_custom_call.1} parent=11 // pred_check
          %p392 = pneg %p225
        $region34: #{tpu_custom_call.1} parent=11 // pred_check_branch
          %394 = sbr.rel (%p392) target = $region36
        $region35: #{tpu_custom_call.1} parent=11 // pred_region
          %s396 = ssub.s32 16, 16
          %397 = vsyncadd [#allocation10], %s396
          %s399 = sshll.u32 [#allocation11], 4
          %s400 = int_to_ptr.vmem [resolvable:$true] %s399
          %402 = dma.hbm_to_vmem [thread:$0]  %s7, 16, %s400, [#allocation10]
        $region36: #{tpu_custom_call.1} parent=11 // pred_fallthru
          _
        // Predicated region
        $region37: #{tpu_custom_call.1} parent=11 // pred_check
          %p403 = pneg %p246
        $region38: #{tpu_custom_call.1} parent=11 // pred_check_branch
          %405 = sbr.rel (%p403) target = $region40
        $region39: #{tpu_custom_call.1} parent=11 // pred_region
          %s407 = ssub.s32 256, 256
          %408 = vsyncadd [#allocation13], %s407
          %s409 = sshll.u32 [#allocation12], 4
          %s410 = int_to_ptr.vmem [resolvable:$true] %s409
          %415 = dma.hbm_to_vmem [thread:$0]  %s8, 256, %s410, [#allocation13], 64, 64, 4
        $region40: #{tpu_custom_call.1} parent=11 // pred_fallthru
          _
        // Predicated region
        $region41: #{tpu_custom_call.1} parent=11 // pred_check
          %p416 = pneg %p267
        $region42: #{tpu_custom_call.1} parent=11 // pred_check_branch
          %418 = sbr.rel (%p416) target = $region44
        $region43: #{tpu_custom_call.1} parent=11 // pred_region
          _
        $region44: #{tpu_custom_call.1} parent=11 // pred_fallthru
          _
        // Predicated region
        $region45: #{tpu_custom_call.1} parent=11 // pred_check
          %p419 = pneg %p288
        $region46: #{tpu_custom_call.1} parent=11 // pred_check_branch
          %421 = sbr.rel (%p419) target = $region48
        $region47: #{tpu_custom_call.1} parent=11 // pred_region
          _
        $region48: #{tpu_custom_call.1} parent=11 // pred_fallthru
          _
      $region12: #{tpu_custom_call.1} parent=5 // pred_fallthru
        _
      %p422 = scmp.lt.s32.totalorder %s33, 2
      // Predicated region
      $region49: #{tpu_custom_call.1} parent=5 // pred_check
        %p423 = pneg %p422
      $region50: #{tpu_custom_call.1} parent=5 // pred_check_branch
        %425 = sbr.rel (%p423) target = $region52
      $region51: #{tpu_custom_call.1} parent=5 // pred_region
        // Predicated region
        $region53: #{tpu_custom_call.1} parent=51 // pred_check
          %p426 = pneg %p67
        $region54: #{tpu_custom_call.1} parent=51 // pred_check_branch
          %428 = sbr.rel (%p426) target = $region56
        $region55: #{tpu_custom_call.1} parent=51 // pred_region
          %s429 = sand.u32 %s57, 1
          %s430 = scalar_lea.sflag [#allocation4], %s429
          %s431 = sand.u32 %s57, 1
          %s432 = smul.addr %s431, 8
          %s433 = scalar_lea.vmem [#allocation3], %s432
          %s435 = ssub.s32 128, 128
          %436 = vsyncadd %s430, %s435
          %s437 = sadd.s32 %s41, %s40
          %s438 = smul.addr %s437, 128
          %s439 = scalar_lea.hbm %s0, %s438
          %s441 = sshll.u32 %s433, 4
          %s442 = int_to_ptr.vmem [resolvable:$true] %s441
          %444 = dma.hbm_to_vmem [thread:$0]  %s439, 128, %s442, %s430
        $region56: #{tpu_custom_call.1} parent=51 // pred_fallthru
          _
        // Predicated region
        $region57: #{tpu_custom_call.1} parent=51 // pred_check
          %p445 = pneg %p93
        $region58: #{tpu_custom_call.1} parent=51 // pred_check_branch
          %447 = sbr.rel (%p445) target = $region60
        $region59: #{tpu_custom_call.1} parent=51 // pred_region
          %s448 = sand.u32 %s33, 1
          %s449 = scalar_lea.sflag [#allocation7], %s448
          %s450 = sand.u32 %s83, 1
          %s451 = smul.addr %s450, 8
          %s452 = scalar_lea.vmem [#allocation6], %s451
          %s454 = ssub.s32 128, 128
          %455 = vsyncadd %s449, %s454
          %s456 = smul.addr %s40, 128
          %s457 = scalar_lea.hbm %s1, %s456
          %s459 = sshll.u32 %s452, 4
          %s460 = int_to_ptr.vmem [resolvable:$true] %s459
          %462 = dma.hbm_to_vmem [thread:$0]  %s457, 128, %s460, %s449
        $region60: #{tpu_custom_call.1} parent=51 // pred_fallthru
          _
      $region52: #{tpu_custom_call.1} parent=5 // pred_fallthru
        _
      %p463 = scmp.le.s32.totalorder 1, %s33
      %p464 = scmp.lt.s32.totalorder %s33, 3
      %p465 = pnand %p463, %p464
      %p466 = pneg %p465
      // Predicated region
      $region61: #{tpu_custom_call.1} parent=5 // pred_check
        _
      $region62: #{tpu_custom_call.1} parent=5 // pred_check_branch
        %468 = sbr.rel (%p465) target = $region64
      $region63: #{tpu_custom_call.1} parent=5 // pred_region
        %s469 = ssub.s32 %s33, 1
        %s470 = sand.u32 %s60, 1
        %s471 = scalar_lea.sflag [#allocation4], %s470
        %s472 = sand.u32 %s60, 1
        %s473 = smul.addr %s472, 8
        %s474 = scalar_lea.vmem [#allocation3], %s473
        // Predicated region
        $region65: #{tpu_custom_call.1} parent=63 // pred_check
          %p475 = pneg %p73
        $region66: #{tpu_custom_call.1} parent=63 // pred_check_branch
          %477 = sbr.rel (%p475) target = $region68
        $region67: #{tpu_custom_call.1} parent=63 // pred_region
          %478 = dma.done %s471, 128
        $region68: #{tpu_custom_call.1} parent=63 // pred_fallthru
          _
        %s479 = sand.u32 %s38, 1
        %s480 = scalar_lea.sflag [#allocation7], %s479
        %s481 = sand.u32 %s86, 1
        %s482 = smul.addr %s481, 8
        %s483 = scalar_lea.vmem [#allocation6], %s482
        // Predicated region
        $region69: #{tpu_custom_call.1} parent=63 // pred_check
          %p484 = pneg %p99
        $region70: #{tpu_custom_call.1} parent=63 // pred_check_branch
          %486 = sbr.rel (%p484) target = $region72
        $region71: #{tpu_custom_call.1} parent=63 // pred_region
          %487 = dma.done %s480, 128
        $region72: #{tpu_custom_call.1} parent=63 // pred_fallthru
          _
        // Predicated region
        $region73: #{tpu_custom_call.1} parent=63 // pred_check
          %p488 = pneg %p120
        $region74: #{tpu_custom_call.1} parent=63 // pred_check_branch
          %490 = sbr.rel (%p488) target = $region76
        $region75: #{tpu_custom_call.1} parent=63 // pred_region
          %491 = dma.done [#allocation7], 256
        $region76: #{tpu_custom_call.1} parent=63 // pred_fallthru
          _
        // Predicated region
        $region77: #{tpu_custom_call.1} parent=63 // pred_check
          %p492 = pneg %p162
        $region78: #{tpu_custom_call.1} parent=63 // pred_check_branch
          %494 = sbr.rel (%p492) target = $region80
        $region79: #{tpu_custom_call.1} parent=63 // pred_region
          %495 = dma.done [#allocation10], 256
        $region80: #{tpu_custom_call.1} parent=63 // pred_fallthru
          _
        // Predicated region
        $region81: #{tpu_custom_call.1} parent=63 // pred_check
          %p496 = pneg %p225
        $region82: #{tpu_custom_call.1} parent=63 // pred_check_branch
          %498 = sbr.rel (%p496) target = $region84
        $region83: #{tpu_custom_call.1} parent=63 // pred_region
          %499 = dma.done [#allocation10], 16
        $region84: #{tpu_custom_call.1} parent=63 // pred_fallthru
          _
        // Predicated region
        $region85: #{tpu_custom_call.1} parent=63 // pred_check
          %p500 = pneg %p246
        $region86: #{tpu_custom_call.1} parent=63 // pred_check_branch
          %502 = sbr.rel (%p500) target = $region88
        $region87: #{tpu_custom_call.1} parent=63 // pred_region
          %503 = dma.done [#allocation13], 256
        $region88: #{tpu_custom_call.1} parent=63 // pred_fallthru
          _
        %s504 = sand.u32 %s60, 1
        %s505 = scalar_lea.sflag [#allocation4], %s504
        %s506 = sand.u32 %s60, 1
        %s507 = smul.addr %s506, 8
        %s508 = scalar_lea.vmem [#allocation3], %s507
        %p509 = pneg %p73
        %p510 = pneg %p70
        %s511 = sand.u32 %s38, 1
        %s512 = scalar_lea.sflag [#allocation7], %s511
        %s513 = sand.u32 %s86, 1
        %s514 = smul.addr %s513, 8
        %s515 = scalar_lea.vmem [#allocation6], %s514
        %p516 = pneg %p99
        %p517 = pneg %p96
        %p518 = pneg %p120
        %p519 = pneg %p117
        %p520 = pneg %p141
        %p521 = pneg %p138
        %p522 = pneg %p162
        %p523 = pneg %p159
        %p524 = pneg %p183
        %p525 = pneg %p180
        %p526 = pneg %p204
        %p527 = pneg %p201
        %p528 = pneg %p225
        %p529 = pneg %p222
        %p530 = pneg %p246
        %p531 = pneg %p243
        %p532 = pneg %p267
        %p533 = pneg %p264
        %p534 = pneg %p288
        %p535 = pneg %p285
        %p536 = pneg %p316
        %p537 = pneg %p313
        %s538 = sand.u32 %s303, 1
        %s539 = scalar_lea.sflag [#allocation5], %s538
        %s540 = sand.u32 %s303, 1
        %s541 = smul.addr %s540, 8
        %s542 = scalar_lea.vmem [#allocation14], %s541
        %p543 = pneg %p342
        %p544 = pneg %p339
        %s545 = sand.u32 %s329, 1
        %s546 = scalar_lea.sflag [#allocation16], %s545
        %s547 = sand.u32 %s329, 1
        %s548 = smul.addr %s547, 8
        %s549 = scalar_lea.vmem [#allocation15], %s548
        %p551 = scmp.eq.s32.totalorder %s43, 0
        // Predicated region
        $region89: #{tpu_custom_call.1} parent=63 // pred_check
          %p552 = pneg %p551
        $region90: #{tpu_custom_call.1} parent=63 // pred_check_branch
          %554 = sbr.rel (%p552) target = $region92
        $region91: #{tpu_custom_call.1} parent=63 // pred_region
          %v555 = vld [vmem:[%s483] sm:$0xff]
          %v556 = vpack.c.bf16 %v555, %v555
          %v557 = vld [vmem:[#allocation9] sm:$0xf]
          %v558 = vld [vmem:[#allocation9 + $0x4] sm:$0xf]
          %v559 = vld [vmem:[#allocation9 + $0x8] sm:$0xf]
          %v560 = vld [vmem:[#allocation9 + $0xc] sm:$0xf]
          %v561 = vld [vmem:[%s5] sm:$0x1]
          %v563 = vlaneseq
          %v564 = vshrl.u32 %v563, 7
          %v565 = vsub.s32 0, %v564
          %v566 = vrot.slane %v561, %v565
          %v572 = vunpack.c.l.b16 %v557
          %v573 = vunpack.c.l.b16 %v558
          %v574 = vunpack.c.l.b16 %v559
          %v575 = vunpack.c.l.b16 %v560
          %v576 = vpack.c.b16 %v573, %v572
          %v577 = vpack.c.b16 %v575, %v574
          %vm580 = vcmask 261120
          %v582 = vsel %vm580, %v556, 0
          %584 = vmatprep.subr.bf16.mxu0 0
          %585 = vmatpush1.bf16.msra.mxu0 %v576
          %586 = vmatprep.subr.bf16.mxu0 0
          %587 = vmatpush1.bf16.msra.mxu0 %v577
          %588 = vmatprep.subr.bf16.mxu0 0
          %589 = vmatpush1.bf16.msra.mxu0 0
          %590 = vmatprep.subr.bf16.mxu0 0
          %591 = vmatpush1.bf16.msra.mxu0 0
          %592 = vmatprep.subr.bf16.mxu0 0
          %593 = vmatpush1.bf16.msra.mxu0 0
          %594 = vmatprep.subr.bf16.mxu0 0
          %595 = vmatpush1.bf16.msra.mxu0 0
          %596 = vmatprep.subr.bf16.mxu0 0
          %597 = vmatpush1.bf16.msra.mxu0 0
          %598 = vmatprep.subr.bf16.mxu0 0
          %599 = vmatpush1.bf16.msra.mxu0 0
          %600 = vmatprep.subr.bf16.mxu0 0
          %601 = vmatpush1.bf16.msra.mxu0 0
          %602 = vmatprep.subr.bf16.mxu0 0
          %603 = vmatpush1.bf16.msra.mxu0 0
          %604 = vmatprep.subr.bf16.mxu0 0
          %605 = vmatpush1.bf16.msra.mxu0 0
          %606 = vmatprep.subr.bf16.mxu0 0
          %607 = vmatpush1.bf16.msra.mxu0 0
          %608 = vmatprep.subr.bf16.mxu0 0
          %609 = vmatpush1.bf16.msra.mxu0 0
          %610 = vmatprep.subr.bf16.mxu0 0
          %611 = vmatpush1.bf16.msra.mxu0 0
          %612 = vmatprep.subr.bf16.mxu0 0
          %613 = vmatpush1.bf16.msra.mxu0 0
          %614 = vmatprep.subr.bf16.mxu0 0
          %615 = vmatpush1.bf16.msra.mxu0 0
          %616 = vmatprep.mubr.bf16.mxu0 0
          %617 = vmatmul.mubr.bf16.gmra.mrb[0].mxu0 %v582
          %v618 = vpop.f32.mrb[0].mxu0
          %v619 = vadd.f32 %v566, %v618
          %v620 = vpop.f32.mrb[0].mxu0
          %v621 = vpop.f32.mrb[0].mxu0
          %v622 = vpop.f32.mrb[0].mxu0
          %623 = vdwg.mxu0
          %v624 = vpack.c.bf16 %v619, %v619
          %vm625 = vcmask 519168
          %626 = vst.msk [vmem:[#allocation2] sm:$0xf] %vm625, %v624
          %vm627 = vcmask 523264
          %628 = vst.msk [vmem:[%s549] sm:$0xff] %vm627, 0.0
        $region92: #{tpu_custom_call.1} parent=63 // pred_fallthru
          _
        %v629 = vld [vmem:[%s474] sm:$0xff]
        %v630 = vpack.c.bf16 %v629, %v629
        %v631 = vld [vmem:[#allocation8] sm:$0xf]
        %v632 = vld [vmem:[#allocation8 + $0x4] sm:$0xf]
        %v633 = vld [vmem:[#allocation8 + $0x8] sm:$0xf]
        %v634 = vld [vmem:[#allocation8 + $0xc] sm:$0xf]
        %v635 = vld [vmem:[%s3] sm:$0x1]
        %v637 = vlaneseq
        %v638 = vshrl.u32 %v637, 7
        %v639 = vsub.s32 0, %v638
        %v640 = vrot.slane %v635, %v639
        %v646 = vunpack.c.l.b16 %v631
        %v647 = vunpack.c.l.b16 %v632
        %v648 = vunpack.c.l.b16 %v633
        %v649 = vunpack.c.l.b16 %v634
        %v650 = vpack.c.b16 %v647, %v646
        %v651 = vpack.c.b16 %v649, %v648
        %vm654 = vcmask 261120
        %v656 = vsel %vm654, %v630, 0
        %658 = vmatprep.subr.bf16.mxu0 0
        %659 = vmatpush1.bf16.msra.mxu0 %v650
        %660 = vmatprep.subr.bf16.mxu0 0
        %661 = vmatpush1.bf16.msra.mxu0 %v651
        %662 = vmatprep.subr.bf16.mxu0 0
        %663 = vmatpush1.bf16.msra.mxu0 0
        %664 = vmatprep.subr.bf16.mxu0 0
        %665 = vmatpush1.bf16.msra.mxu0 0
        %666 = vmatprep.subr.bf16.mxu0 0
        %667 = vmatpush1.bf16.msra.mxu0 0
        %668 = vmatprep.subr.bf16.mxu0 0
        %669 = vmatpush1.bf16.msra.mxu0 0
        %670 = vmatprep.subr.bf16.mxu0 0
        %671 = vmatpush1.bf16.msra.mxu0 0
        %672 = vmatprep.subr.bf16.mxu0 0
        %673 = vmatpush1.bf16.msra.mxu0 0
        %674 = vmatprep.subr.bf16.mxu0 0
        %675 = vmatpush1.bf16.msra.mxu0 0
        %676 = vmatprep.subr.bf16.mxu0 0
        %677 = vmatpush1.bf16.msra.mxu0 0
        %678 = vmatprep.subr.bf16.mxu0 0
        %679 = vmatpush1.bf16.msra.mxu0 0
        %680 = vmatprep.subr.bf16.mxu0 0
        %681 = vmatpush1.bf16.msra.mxu0 0
        %682 = vmatprep.subr.bf16.mxu0 0
        %683 = vmatpush1.bf16.msra.mxu0 0
        %684 = vmatprep.subr.bf16.mxu0 0
        %685 = vmatpush1.bf16.msra.mxu0 0
        %686 = vmatprep.subr.bf16.mxu0 0
        %687 = vmatpush1.bf16.msra.mxu0 0
        %688 = vmatprep.subr.bf16.mxu0 0
        %689 = vmatpush1.bf16.msra.mxu0 0
        %690 = vmatprep.mubr.bf16.mxu0 0
        %691 = vmatmul.mubr.bf16.gmra.mrb[0].mxu0 %v656
        %v692 = vpop.f32.mrb[0].mxu0
        %v693 = vadd.f32 %v640, %v692
        %v694 = vpop.f32.mrb[0].mxu0
        %v695 = vpop.f32.mrb[0].mxu0
        %v696 = vpop.f32.mrb[0].mxu0
        %697 = vdwg.mxu0
        %v698 = vpack.c.bf16 %v693, %v693
        %v699 = vld [vmem:[#allocation2] sm:$0xf]
        %vm700 = vcmask 64512
        %v702 = vsel %vm700, %v698, 0
        %v705 = vsel %vm700, %v699, 0
        %707 = vmatprep.subr.bf16.mxu0 0
        %708 = vmatpush1.bf16.xpose.msra.mxu0 %v705
        %709 = vmatprep.subr.bf16.mxu0 0
        %710 = vmatpush1.bf16.xpose.msra.mxu0 0
        %711 = vmatprep.subr.bf16.mxu0 0
        %712 = vmatpush1.bf16.xpose.msra.mxu0 0
        %713 = vmatprep.subr.bf16.mxu0 0
        %714 = vmatpush1.bf16.xpose.msra.mxu0 0
        %715 = vmatprep.subr.bf16.mxu0 0
        %716 = vmatpush1.bf16.xpose.msra.mxu0 0
        %717 = vmatprep.subr.bf16.mxu0 0
        %718 = vmatpush1.bf16.xpose.msra.mxu0 0
        %719 = vmatprep.subr.bf16.mxu0 0
        %720 = vmatpush1.bf16.xpose.msra.mxu0 0
        %721 = vmatprep.subr.bf16.mxu0 0
        %722 = vmatpush1.bf16.xpose.msra.mxu0 0
        %723 = vmatprep.subr.bf16.mxu0 0
        %724 = vmatpush1.bf16.xpose.msra.mxu0 0
        %725 = vmatprep.subr.bf16.mxu0 0
        %726 = vmatpush1.bf16.xpose.msra.mxu0 0
        %727 = vmatprep.subr.bf16.mxu0 0
        %728 = vmatpush1.bf16.xpose.msra.mxu0 0
        %729 = vmatprep.subr.bf16.mxu0 0
        %730 = vmatpush1.bf16.xpose.msra.mxu0 0
        %731 = vmatprep.subr.bf16.mxu0 0
        %732 = vmatpush1.bf16.xpose.msra.mxu0 0
        %733 = vmatprep.subr.bf16.mxu0 0
        %734 = vmatpush1.bf16.xpose.msra.mxu0 0
        %735 = vmatprep.subr.bf16.mxu0 0
        %736 = vmatpush1.bf16.xpose.msra.mxu0 0
        %737 = vmatprep.subr.bf16.mxu0 0
        %738 = vmatpush1.bf16.xpose.msra.mxu0 0
        %739 = vmatprep.mubr.bf16.mxu0 0
        %740 = vmatmul.mubr.bf16.gmra.mrb[0].mxu0 %v702
        %v741 = vpop.f32.mrb[0].mxu0
        %v742 = vadd.f32 0.0, %v741
        %v743 = vpop.f32.mrb[0].mxu0
        %v744 = vpop.f32.mrb[0].mxu0
        %v745 = vpop.f32.mrb[0].mxu0
        %746 = vdwg.mxu0
        %v747 = vmul.f32 %v742, 0.35355338
        %v748 = vsel %vm700, %v747, -inf
        %749 = vmax.xlane.f32.xlu0 %v748
        %v750 = vpop.xlane.xlu0 %749
        %v751 = vsub.f32 %v747, %v750
        %v752 = vmul.f32 %v751, 1.442695
        %v753 = vpow.pop %v752
        %v754 = vsel %vm700, %v753, 0.0
        %755 = vadd.xlane.f32.xlu0 %v754
        %v756 = vpop.xlane.xlu0 %755
        %v757 = vrcp.pop %v756
        %v758 = vmul.f32 %v753, %v757
        %v759 = vpack.c.bf16 %v758, %v758
        %v761 = vunpack.c.l.b16 %v699
        %v762 = vpack.c.b16 %v761, %v761
        %763 = vrot.lane.b32.xlu0 %v762, 96
        %v764 = vpop.permute.xlu0 %763
        %v766 = vsel %vm700, %v759, 0
        %vm768 = vcmask 1043456
        %v770 = vsel %vm768, %v764, 0
        %772 = vmatprep.subr.bf16.mxu0 0
        %773 = vmatpush1.bf16.msra.mxu0 %v770
        %774 = vmatprep.subr.bf16.mxu0 0
        %775 = vmatpush1.bf16.msra.mxu0 0
        %776 = vmatprep.subr.bf16.mxu0 0
        %777 = vmatpush1.bf16.msra.mxu0 0
        %778 = vmatprep.subr.bf16.mxu0 0
        %779 = vmatpush1.bf16.msra.mxu0 0
        %780 = vmatprep.subr.bf16.mxu0 0
        %781 = vmatpush1.bf16.msra.mxu0 0
        %782 = vmatprep.subr.bf16.mxu0 0
        %783 = vmatpush1.bf16.msra.mxu0 0
        %784 = vmatprep.subr.bf16.mxu0 0
        %785 = vmatpush1.bf16.msra.mxu0 0
        %786 = vmatprep.subr.bf16.mxu0 0
        %787 = vmatpush1.bf16.msra.mxu0 0
        %788 = vmatprep.subr.bf16.mxu0 0
        %789 = vmatpush1.bf16.msra.mxu0 0
        %790 = vmatprep.subr.bf16.mxu0 0
        %791 = vmatpush1.bf16.msra.mxu0 0
        %792 = vmatprep.subr.bf16.mxu0 0
        %793 = vmatpush1.bf16.msra.mxu0 0
        %794 = vmatprep.subr.bf16.mxu0 0
        %795 = vmatpush1.bf16.msra.mxu0 0
        %796 = vmatprep.subr.bf16.mxu0 0
        %797 = vmatpush1.bf16.msra.mxu0 0
        %798 = vmatprep.subr.bf16.mxu0 0
        %799 = vmatpush1.bf16.msra.mxu0 0
        %800 = vmatprep.subr.bf16.mxu0 0
        %801 = vmatpush1.bf16.msra.mxu0 0
        %802 = vmatprep.subr.bf16.mxu0 0
        %803 = vmatpush1.bf16.msra.mxu0 0
        %804 = vmatprep.mubr.bf16.mxu0 0
        %805 = vmatmul.mubr.bf16.gmra.mrb[0].mxu0 %v766
        %v806 = vpop.f32.mrb[0].mxu0
        %v807 = vadd.f32 0.0, %v806
        %v808 = vpop.f32.mrb[0].mxu0
        %v809 = vpop.f32.mrb[0].mxu0
        %v810 = vpop.f32.mrb[0].mxu0
        %811 = vdwg.mxu0
        %813 = vrot.lane.b32.xlu0 %v698, 120
        %v814 = vpop.permute.xlu0 %813
        %815 = vrot.lane.b32.xlu0 %v762, 120
        %v816 = vpop.permute.xlu0 %815
        %v818 = vsel %vm700, %v814, 0
        %v821 = vsel %vm700, %v816, 0
        %823 = vmatprep.subr.bf16.mxu0 0
        %824 = vmatpush1.bf16.xpose.msra.mxu0 %v821
        %825 = vmatprep.subr.bf16.mxu0 0
        %826 = vmatpush1.bf16.xpose.msra.mxu0 0
        %827 = vmatprep.subr.bf16.mxu0 0
        %828 = vmatpush1.bf16.xpose.msra.mxu0 0
        %829 = vmatprep.subr.bf16.mxu0 0
        %830 = vmatpush1.bf16.xpose.msra.mxu0 0
        %831 = vmatprep.subr.bf16.mxu0 0
        %832 = vmatpush1.bf16.xpose.msra.mxu0 0
        %833 = vmatprep.subr.bf16.mxu0 0
        %834 = vmatpush1.bf16.xpose.msra.mxu0 0
        %835 = vmatprep.subr.bf16.mxu0 0
        %836 = vmatpush1.bf16.xpose.msra.mxu0 0
        %837 = vmatprep.subr.bf16.mxu0 0
        %838 = vmatpush1.bf16.xpose.msra.mxu0 0
        %839 = vmatprep.subr.bf16.mxu0 0
        %840 = vmatpush1.bf16.xpose.msra.mxu0 0
        %841 = vmatprep.subr.bf16.mxu0 0
        %842 = vmatpush1.bf16.xpose.msra.mxu0 0
        %843 = vmatprep.subr.bf16.mxu0 0
        %844 = vmatpush1.bf16.xpose.msra.mxu0 0
        %845 = vmatprep.subr.bf16.mxu0 0
        %846 = vmatpush1.bf16.xpose.msra.mxu0 0
        %847 = vmatprep.subr.bf16.mxu0 0
        %848 = vmatpush1.bf16.xpose.msra.mxu0 0
        %849 = vmatprep.subr.bf16.mxu0 0
        %850 = vmatpush1.bf16.xpose.msra.mxu0 0
        %851 = vmatprep.subr.bf16.mxu0 0
        %852 = vmatpush1.bf16.xpose.msra.mxu0 0
        %853 = vmatprep.subr.bf16.mxu0 0
        %854 = vmatpush1.bf16.xpose.msra.mxu0 0
        %855 = vmatprep.mubr.bf16.mxu0 0
        %856 = vmatmul.mubr.bf16.gmra.mrb[0].mxu0 %v818
        %v857 = vpop.f32.mrb[0].mxu0
        %v858 = vadd.f32 0.0, %v857
        %v859 = vpop.f32.mrb[0].mxu0
        %v860 = vpop.f32.mrb[0].mxu0
        %v861 = vpop.f32.mrb[0].mxu0
        %862 = vdwg.mxu0
        %v863 = vmul.f32 %v858, 0.35355338
        %v864 = vsel %vm700, %v863, -inf
        %865 = vmax.xlane.f32.xlu0 %v864
        %v866 = vpop.xlane.xlu0 %865
        %v867 = vsub.f32 %v863, %v866
        %v868 = vmul.f32 %v867, 1.442695
        %v869 = vpow.pop %v868
        %v870 = vsel %vm700, %v869, 0.0
        %871 = vadd.xlane.f32.xlu0 %v870
        %v872 = vpop.xlane.xlu0 %871
        %v873 = vrcp.pop %v872
        %v874 = vmul.f32 %v869, %v873
        %v875 = vpack.c.bf16 %v874, %v874
        %876 = vrot.lane.b32.xlu0 %v762, 88
        %v877 = vpop.permute.xlu0 %876
        %v879 = vsel %vm700, %v875, 0
        %v882 = vsel %vm768, %v877, 0
        %884 = vmatprep.subr.bf16.mxu0 0
        %885 = vmatpush1.bf16.msra.mxu0 %v882
        %886 = vmatprep.subr.bf16.mxu0 0
        %887 = vmatpush1.bf16.msra.mxu0 0
        %888 = vmatprep.subr.bf16.mxu0 0
        %889 = vmatpush1.bf16.msra.mxu0 0
        %890 = vmatprep.subr.bf16.mxu0 0
        %891 = vmatpush1.bf16.msra.mxu0 0
        %892 = vmatprep.subr.bf16.mxu0 0
        %893 = vmatpush1.bf16.msra.mxu0 0
        %894 = vmatprep.subr.bf16.mxu0 0
        %895 = vmatpush1.bf16.msra.mxu0 0
        %896 = vmatprep.subr.bf16.mxu0 0
        %897 = vmatpush1.bf16.msra.mxu0 0
        %898 = vmatprep.subr.bf16.mxu0 0
        %899 = vmatpush1.bf16.msra.mxu0 0
        %900 = vmatprep.subr.bf16.mxu0 0
        %901 = vmatpush1.bf16.msra.mxu0 0
        %902 = vmatprep.subr.bf16.mxu0 0
        %903 = vmatpush1.bf16.msra.mxu0 0
        %904 = vmatprep.subr.bf16.mxu0 0
        %905 = vmatpush1.bf16.msra.mxu0 0
        %906 = vmatprep.subr.bf16.mxu0 0
        %907 = vmatpush1.bf16.msra.mxu0 0
        %908 = vmatprep.subr.bf16.mxu0 0
        %909 = vmatpush1.bf16.msra.mxu0 0
        %910 = vmatprep.subr.bf16.mxu0 0
        %911 = vmatpush1.bf16.msra.mxu0 0
        %912 = vmatprep.subr.bf16.mxu0 0
        %913 = vmatpush1.bf16.msra.mxu0 0
        %914 = vmatprep.subr.bf16.mxu0 0
        %915 = vmatpush1.bf16.msra.mxu0 0
        %916 = vmatprep.mubr.bf16.mxu0 0
        %917 = vmatmul.mubr.bf16.gmra.mrb[0].mxu0 %v879
        %v918 = vpop.f32.mrb[0].mxu0
        %v919 = vadd.f32 0.0, %v918
        %v920 = vpop.f32.mrb[0].mxu0
        %v921 = vpop.f32.mrb[0].mxu0
        %v922 = vpop.f32.mrb[0].mxu0
        %923 = vdwg.mxu0
        %924 = vrot.lane.b32.xlu0 %v698, 112
        %v925 = vpop.permute.xlu0 %924
        %926 = vrot.lane.b32.xlu0 %v762, 112
        %v927 = vpop.permute.xlu0 %926
        %v929 = vsel %vm700, %v925, 0
        %v932 = vsel %vm700, %v927, 0
        %934 = vmatprep.subr.bf16.mxu0 0
        %935 = vmatpush1.bf16.xpose.msra.mxu0 %v932
        %936 = vmatprep.subr.bf16.mxu0 0
        %937 = vmatpush1.bf16.xpose.msra.mxu0 0
        %938 = vmatprep.subr.bf16.mxu0 0
        %939 = vmatpush1.bf16.xpose.msra.mxu0 0
        %940 = vmatprep.subr.bf16.mxu0 0
        %941 = vmatpush1.bf16.xpose.msra.mxu0 0
        %942 = vmatprep.subr.bf16.mxu0 0
        %943 = vmatpush1.bf16.xpose.msra.mxu0 0
        %944 = vmatprep.subr.bf16.mxu0 0
        %945 = vmatpush1.bf16.xpose.msra.mxu0 0
        %946 = vmatprep.subr.bf16.mxu0 0
        %947 = vmatpush1.bf16.xpose.msra.mxu0 0
        %948 = vmatprep.subr.bf16.mxu0 0
        %949 = vmatpush1.bf16.xpose.msra.mxu0 0
        %950 = vmatprep.subr.bf16.mxu0 0
        %951 = vmatpush1.bf16.xpose.msra.mxu0 0
        %952 = vmatprep.subr.bf16.mxu0 0
        %953 = vmatpush1.bf16.xpose.msra.mxu0 0
        %954 = vmatprep.subr.bf16.mxu0 0
        %955 = vmatpush1.bf16.xpose.msra.mxu0 0
        %956 = vmatprep.subr.bf16.mxu0 0
        %957 = vmatpush1.bf16.xpose.msra.mxu0 0
        %958 = vmatprep.subr.bf16.mxu0 0
        %959 = vmatpush1.bf16.xpose.msra.mxu0 0
        %960 = vmatprep.subr.bf16.mxu0 0
        %961 = vmatpush1.bf16.xpose.msra.mxu0 0
        %962 = vmatprep.subr.bf16.mxu0 0
        %963 = vmatpush1.bf16.xpose.msra.mxu0 0
        %964 = vmatprep.subr.bf16.mxu0 0
        %965 = vmatpush1.bf16.xpose.msra.mxu0 0
        %966 = vmatprep.mubr.bf16.mxu0 0
        %967 = vmatmul.mubr.bf16.gmra.mrb[0].mxu0 %v929
        %v968 = vpop.f32.mrb[0].mxu0
        %v969 = vadd.f32 0.0, %v968
        %v970 = vpop.f32.mrb[0].mxu0
        %v971 = vpop.f32.mrb[0].mxu0
        %v972 = vpop.f32.mrb[0].mxu0
        %973 = vdwg.mxu0
        %v974 = vmul.f32 %v969, 0.35355338
        %v975 = vsel %vm700, %v974, -inf
        %976 = vmax.xlane.f32.xlu0 %v975
        %v977 = vpop.xlane.xlu0 %976
        %v978 = vsub.f32 %v974, %v977
        %v979 = vmul.f32 %v978, 1.442695
        %v980 = vpow.pop %v979
        %v981 = vsel %vm700, %v980, 0.0
        %982 = vadd.xlane.f32.xlu0 %v981
        %v983 = vpop.xlane.xlu0 %982
        %v984 = vrcp.pop %v983
        %v985 = vmul.f32 %v980, %v984
        %v986 = vpack.c.bf16 %v985, %v985
        %987 = vrot.lane.b32.xlu0 %v762, 80
        %v988 = vpop.permute.xlu0 %987
        %v990 = vsel %vm700, %v986, 0
        %v993 = vsel %vm768, %v988, 0
        %995 = vmatprep.subr.bf16.mxu0 0
        %996 = vmatpush1.bf16.msra.mxu0 %v993
        %997 = vmatprep.subr.bf16.mxu0 0
        %998 = vmatpush1.bf16.msra.mxu0 0
        %999 = vmatprep.subr.bf16.mxu0 0
        %1000 = vmatpush1.bf16.msra.mxu0 0
        %1001 = vmatprep.subr.bf16.mxu0 0
        %1002 = vmatpush1.bf16.msra.mxu0 0
        %1003 = vmatprep.subr.bf16.mxu0 0
        %1004 = vmatpush1.bf16.msra.mxu0 0
        %1005 = vmatprep.subr.bf16.mxu0 0
        %1006 = vmatpush1.bf16.msra.mxu0 0
        %1007 = vmatprep.subr.bf16.mxu0 0
        %1008 = vmatpush1.bf16.msra.mxu0 0
        %1009 = vmatprep.subr.bf16.mxu0 0
        %1010 = vmatpush1.bf16.msra.mxu0 0
        %1011 = vmatprep.subr.bf16.mxu0 0
        %1012 = vmatpush1.bf16.msra.mxu0 0
        %1013 = vmatprep.subr.bf16.mxu0 0
        %1014 = vmatpush1.bf16.msra.mxu0 0
        %1015 = vmatprep.subr.bf16.mxu0 0
        %1016 = vmatpush1.bf16.msra.mxu0 0
        %1017 = vmatprep.subr.bf16.mxu0 0
        %1018 = vmatpush1.bf16.msra.mxu0 0
        %1019 = vmatprep.subr.bf16.mxu0 0
        %1020 = vmatpush1.bf16.msra.mxu0 0
        %1021 = vmatprep.subr.bf16.mxu0 0
        %1022 = vmatpush1.bf16.msra.mxu0 0
        %1023 = vmatprep.subr.bf16.mxu0 0
        %1024 = vmatpush1.bf16.msra.mxu0 0
        %1025 = vmatprep.subr.bf16.mxu0 0
        %1026 = vmatpush1.bf16.msra.mxu0 0
        %1027 = vmatprep.mubr.bf16.mxu0 0
        %1028 = vmatmul.mubr.bf16.gmra.mrb[0].mxu0 %v990
        %v1029 = vpop.f32.mrb[0].mxu0
        %v1030 = vadd.f32 0.0, %v1029
        %v1031 = vpop.f32.mrb[0].mxu0
        %v1032 = vpop.f32.mrb[0].mxu0
        %v1033 = vpop.f32.mrb[0].mxu0
        %1034 = vdwg.mxu0
        %1035 = vrot.lane.b32.xlu0 %v698, 104
        %v1036 = vpop.permute.xlu0 %1035
        %1037 = vrot.lane.b32.xlu0 %v762, 104
        %v1038 = vpop.permute.xlu0 %1037
        %v1040 = vsel %vm700, %v1036, 0
        %v1043 = vsel %vm700, %v1038, 0
        %1045 = vmatprep.subr.bf16.mxu0 0
        %1046 = vmatpush1.bf16.xpose.msra.mxu0 %v1043
        %1047 = vmatprep.subr.bf16.mxu0 0
        %1048 = vmatpush1.bf16.xpose.msra.mxu0 0
        %1049 = vmatprep.subr.bf16.mxu0 0
        %1050 = vmatpush1.bf16.xpose.msra.mxu0 0
        %1051 = vmatprep.subr.bf16.mxu0 0
        %1052 = vmatpush1.bf16.xpose.msra.mxu0 0
        %1053 = vmatprep.subr.bf16.mxu0 0
        %1054 = vmatpush1.bf16.xpose.msra.mxu0 0
        %1055 = vmatprep.subr.bf16.mxu0 0
        %1056 = vmatpush1.bf16.xpose.msra.mxu0 0
        %1057 = vmatprep.subr.bf16.mxu0 0
        %1058 = vmatpush1.bf16.xpose.msra.mxu0 0
        %1059 = vmatprep.subr.bf16.mxu0 0
        %1060 = vmatpush1.bf16.xpose.msra.mxu0 0
        %1061 = vmatprep.subr.bf16.mxu0 0
        %1062 = vmatpush1.bf16.xpose.msra.mxu0 0
        %1063 = vmatprep.subr.bf16.mxu0 0
        %1064 = vmatpush1.bf16.xpose.msra.mxu0 0
        %1065 = vmatprep.subr.bf16.mxu0 0
        %1066 = vmatpush1.bf16.xpose.msra.mxu0 0
        %1067 = vmatprep.subr.bf16.mxu0 0
        %1068 = vmatpush1.bf16.xpose.msra.mxu0 0
        %1069 = vmatprep.subr.bf16.mxu0 0
        %1070 = vmatpush1.bf16.xpose.msra.mxu0 0
        %1071 = vmatprep.subr.bf16.mxu0 0
        %1072 = vmatpush1.bf16.xpose.msra.mxu0 0
        %1073 = vmatprep.subr.bf16.mxu0 0
        %1074 = vmatpush1.bf16.xpose.msra.mxu0 0
        %1075 = vmatprep.subr.bf16.mxu0 0
        %1076 = vmatpush1.bf16.xpose.msra.mxu0 0
        %1077 = vmatprep.mubr.bf16.mxu0 0
        %1078 = vmatmul.mubr.bf16.gmra.mrb[0].mxu0 %v1040
        %v1079 = vpop.f32.mrb[0].mxu0
        %v1080 = vadd.f32 0.0, %v1079
        %v1081 = vpop.f32.mrb[0].mxu0
        %v1082 = vpop.f32.mrb[0].mxu0
        %v1083 = vpop.f32.mrb[0].mxu0
        %1084 = vdwg.mxu0
        %v1085 = vmul.f32 %v1080, 0.35355338
        %v1086 = vsel %vm700, %v1085, -inf
        %1087 = vmax.xlane.f32.xlu0 %v1086
        %v1088 = vpop.xlane.xlu0 %1087
        %v1089 = vsub.f32 %v1085, %v1088
        %v1090 = vmul.f32 %v1089, 1.442695
        %v1091 = vpow.pop %v1090
        %v1092 = vsel %vm700, %v1091, 0.0
        %1093 = vadd.xlane.f32.xlu0 %v1092
        %v1094 = vpop.xlane.xlu0 %1093
        %v1095 = vrcp.pop %v1094
        %v1096 = vmul.f32 %v1091, %v1095
        %v1097 = vpack.c.bf16 %v1096, %v1096
        %1098 = vrot.lane.b32.xlu0 %v762, 72
        %v1099 = vpop.permute.xlu0 %1098
        %v1101 = vsel %vm700, %v1097, 0
        %v1104 = vsel %vm768, %v1099, 0
        %1106 = vmatprep.subr.bf16.mxu0 0
        %1107 = vmatpush1.bf16.msra.mxu0 %v1104
        %1108 = vmatprep.subr.bf16.mxu0 0
        %1109 = vmatpush1.bf16.msra.mxu0 0
        %1110 = vmatprep.subr.bf16.mxu0 0
        %1111 = vmatpush1.bf16.msra.mxu0 0
        %1112 = vmatprep.subr.bf16.mxu0 0
        %1113 = vmatpush1.bf16.msra.mxu0 0
        %1114 = vmatprep.subr.bf16.mxu0 0
        %1115 = vmatpush1.bf16.msra.mxu0 0
        %1116 = vmatprep.subr.bf16.mxu0 0
        %1117 = vmatpush1.bf16.msra.mxu0 0
        %1118 = vmatprep.subr.bf16.mxu0 0
        %1119 = vmatpush1.bf16.msra.mxu0 0
        %1120 = vmatprep.subr.bf16.mxu0 0
        %1121 = vmatpush1.bf16.msra.mxu0 0
        %1122 = vmatprep.subr.bf16.mxu0 0
        %1123 = vmatpush1.bf16.msra.mxu0 0
        %1124 = vmatprep.subr.bf16.mxu0 0
        %1125 = vmatpush1.bf16.msra.mxu0 0
        %1126 = vmatprep.subr.bf16.mxu0 0
        %1127 = vmatpush1.bf16.msra.mxu0 0
        %1128 = vmatprep.subr.bf16.mxu0 0
        %1129 = vmatpush1.bf16.msra.mxu0 0
        %1130 = vmatprep.subr.bf16.mxu0 0
        %1131 = vmatpush1.bf16.msra.mxu0 0
        %1132 = vmatprep.subr.bf16.mxu0 0
        %1133 = vmatpush1.bf16.msra.mxu0 0
        %1134 = vmatprep.subr.bf16.mxu0 0
        %1135 = vmatpush1.bf16.msra.mxu0 0
        %1136 = vmatprep.subr.bf16.mxu0 0
        %1137 = vmatpush1.bf16.msra.mxu0 0
        %1138 = vmatprep.mubr.bf16.mxu0 0
        %1139 = vmatmul.mubr.bf16.gmra.mrb[0].mxu0 %v1101
        %v1140 = vpop.f32.mrb[0].mxu0
        %v1141 = vadd.f32 0.0, %v1140
        %v1142 = vpop.f32.mrb[0].mxu0
        %v1143 = vpop.f32.mrb[0].mxu0
        %v1144 = vpop.f32.mrb[0].mxu0
        %1145 = vdwg.mxu0
        %1147 = vrot.lane.b32.xlu0 %v919, 8
        %v1148 = vpop.permute.xlu0 %1147
        %1151 = vrot.lane.b32.xlu0 %v1030, 16
        %v1152 = vpop.permute.xlu0 %1151
        %1155 = vrot.lane.b32.xlu0 %v1141, 24
        %v1156 = vpop.permute.xlu0 %1155
        %v1158 = vsel %vm700, %v807, %v1148
        %vm1159 = vcmask 130048
        %v1160 = vsel %vm1159, %v1158, %v1152
        %vm1161 = vcmask 195584
        %v1162 = vsel %vm1161, %v1160, %v1156
        %v1163 = vpack.c.bf16 %v1162, %v1162
        %v1164 = vld [vmem:[%s6] sm:$0xf]
        %v1165 = vld [vmem:[%s6 + $0x4] sm:$0xf]
        %v1166 = vld [vmem:[%s6 + $0x8] sm:$0xf]
        %v1167 = vld [vmem:[%s6 + $0xc] sm:$0xf]
        %v1168 = vld [vmem:[#allocation11] sm:$0x1]
        %v1170 = vlaneseq
        %v1171 = vshrl.u32 %v1170, 7
        %v1172 = vsub.s32 0, %v1171
        %v1173 = vrot.slane %v1168, %v1172
        %v1179 = vunpack.c.l.b16 %v1164
        %v1180 = vunpack.c.l.b16 %v1165
        %v1181 = vunpack.c.l.b16 %v1166
        %v1182 = vunpack.c.l.b16 %v1167
        %v1183 = vpack.c.b16 %v1180, %v1179
        %v1184 = vpack.c.b16 %v1182, %v1181
        %v1188 = vsel %vm654, %v1163, 0
        %1190 = vmatprep.subr.bf16.mxu0 0
        %1191 = vmatpush1.bf16.msra.mxu0 %v1183
        %1192 = vmatprep.subr.bf16.mxu0 0
        %1193 = vmatpush1.bf16.msra.mxu0 %v1184
        %1194 = vmatprep.subr.bf16.mxu0 0
        %1195 = vmatpush1.bf16.msra.mxu0 0
        %1196 = vmatprep.subr.bf16.mxu0 0
        %1197 = vmatpush1.bf16.msra.mxu0 0
        %1198 = vmatprep.subr.bf16.mxu0 0
        %1199 = vmatpush1.bf16.msra.mxu0 0
        %1200 = vmatprep.subr.bf16.mxu0 0
        %1201 = vmatpush1.bf16.msra.mxu0 0
        %1202 = vmatprep.subr.bf16.mxu0 0
        %1203 = vmatpush1.bf16.msra.mxu0 0
        %1204 = vmatprep.subr.bf16.mxu0 0
        %1205 = vmatpush1.bf16.msra.mxu0 0
        %1206 = vmatprep.subr.bf16.mxu0 0
        %1207 = vmatpush1.bf16.msra.mxu0 0
        %1208 = vmatprep.subr.bf16.mxu0 0
        %1209 = vmatpush1.bf16.msra.mxu0 0
        %1210 = vmatprep.subr.bf16.mxu0 0
        %1211 = vmatpush1.bf16.msra.mxu0 0
        %1212 = vmatprep.subr.bf16.mxu0 0
        %1213 = vmatpush1.bf16.msra.mxu0 0
        %1214 = vmatprep.subr.bf16.mxu0 0
        %1215 = vmatpush1.bf16.msra.mxu0 0
        %1216 = vmatprep.subr.bf16.mxu0 0
        %1217 = vmatpush1.bf16.msra.mxu0 0
        %1218 = vmatprep.subr.bf16.mxu0 0
        %1219 = vmatpush1.bf16.msra.mxu0 0
        %1220 = vmatprep.subr.bf16.mxu0 0
        %1221 = vmatpush1.bf16.msra.mxu0 0
        %1222 = vmatprep.mubr.bf16.mxu0 0
        %1223 = vmatmul.mubr.bf16.gmra.mrb[0].mxu0 %v1188
        %v1224 = vpop.f32.mrb[0].mxu0
        %v1225 = vadd.f32 %v1173, %v1224
        %v1226 = vpop.f32.mrb[0].mxu0
        %v1227 = vpop.f32.mrb[0].mxu0
        %v1228 = vpop.f32.mrb[0].mxu0
        %1229 = vdwg.mxu0
        %v1230 = vld [vmem:[#allocation12] sm:$0xf]
        %v1231 = vld [vmem:[#allocation12 + $0x4] sm:$0xf]
        %v1232 = vld [vmem:[#allocation12 + $0x8] sm:$0xf]
        %v1233 = vld [vmem:[#allocation12 + $0xc] sm:$0xf]
        %v1234 = vpack.c.bf16 %v1225, %v1225
        %v1235 = vld [vmem:[%s9] sm:$0xf]
        %v1236 = vld [vmem:[%s9 + $0x4] sm:$0xf]
        %v1237 = vld [vmem:[%s9 + $0x8] sm:$0xf]
        %v1238 = vld [vmem:[%s9 + $0xc] sm:$0xf]
        %v1243 = vunpack.c.l.b16 %v1235
        %v1244 = vunpack.c.l.b16 %v1236
        %v1245 = vunpack.c.l.b16 %v1237
        %v1246 = vunpack.c.l.b16 %v1238
        %v1247 = vpack.c.b16 %v1244, %v1243
        %v1248 = vpack.c.b16 %v1246, %v1245
        %v1252 = vsel %vm654, %v1234, 0
        %1254 = vmatprep.subr.bf16.mxu0 0
        %1255 = vmatpush1.bf16.msra.mxu0 %v1247
        %1256 = vmatprep.subr.bf16.mxu0 0
        %1257 = vmatpush1.bf16.msra.mxu0 %v1248
        %1258 = vmatprep.subr.bf16.mxu0 0
        %1259 = vmatpush1.bf16.msra.mxu0 0
        %1260 = vmatprep.subr.bf16.mxu0 0
        %1261 = vmatpush1.bf16.msra.mxu0 0
        %1262 = vmatprep.subr.bf16.mxu0 0
        %1263 = vmatpush1.bf16.msra.mxu0 0
        %1264 = vmatprep.subr.bf16.mxu0 0
        %1265 = vmatpush1.bf16.msra.mxu0 0
        %1266 = vmatprep.subr.bf16.mxu0 0
        %1267 = vmatpush1.bf16.msra.mxu0 0
        %1268 = vmatprep.subr.bf16.mxu0 0
        %1269 = vmatpush1.bf16.msra.mxu0 0
        %1270 = vmatprep.subr.bf16.mxu0 0
        %1271 = vmatpush1.bf16.msra.mxu0 0
        %1272 = vmatprep.subr.bf16.mxu0 0
        %1273 = vmatpush1.bf16.msra.mxu0 0
        %1274 = vmatprep.subr.bf16.mxu0 0
        %1275 = vmatpush1.bf16.msra.mxu0 0
        %1276 = vmatprep.subr.bf16.mxu0 0
        %1277 = vmatpush1.bf16.msra.mxu0 0
        %1278 = vmatprep.subr.bf16.mxu0 0
        %1279 = vmatpush1.bf16.msra.mxu0 0
        %1280 = vmatprep.subr.bf16.mxu0 0
        %1281 = vmatpush1.bf16.msra.mxu0 0
        %1282 = vmatprep.subr.bf16.mxu0 0
        %1283 = vmatpush1.bf16.msra.mxu0 0
        %1284 = vmatprep.subr.bf16.mxu0 0
        %1285 = vmatpush1.bf16.msra.mxu0 0
        %1286 = vmatprep.mubr.bf16.mxu0 0
        %1287 = vmatmul.mubr.bf16.gmra.mrb[0].mxu0 %v1252
        %v1288 = vpop.f32.mrb[0].mxu0
        %v1289 = vadd.f32 0.0, %v1288
        %v1290 = vpop.f32.mrb[0].mxu0
        %v1291 = vpop.f32.mrb[0].mxu0
        %v1292 = vpop.f32.mrb[0].mxu0
        %1293 = vdwg.mxu0
        %v1298 = vunpack.c.l.b16 %v1230
        %v1299 = vunpack.c.l.b16 %v1231
        %v1300 = vunpack.c.l.b16 %v1232
        %v1301 = vunpack.c.l.b16 %v1233
        %v1302 = vpack.c.b16 %v1299, %v1298
        %v1303 = vpack.c.b16 %v1301, %v1300
        %1306 = vmatprep.subr.bf16.mxu0 0
        %1307 = vmatpush1.bf16.msra.mxu0 %v1302
        %1308 = vmatprep.subr.bf16.mxu0 0
        %1309 = vmatpush1.bf16.msra.mxu0 %v1303
        %1310 = vmatprep.subr.bf16.mxu0 0
        %1311 = vmatpush1.bf16.msra.mxu0 0
        %1312 = vmatprep.subr.bf16.mxu0 0
        %1313 = vmatpush1.bf16.msra.mxu0 0
        %1314 = vmatprep.subr.bf16.mxu0 0
        %1315 = vmatpush1.bf16.msra.mxu0 0
        %1316 = vmatprep.subr.bf16.mxu0 0
        %1317 = vmatpush1.bf16.msra.mxu0 0
        %1318 = vmatprep.subr.bf16.mxu0 0
        %1319 = vmatpush1.bf16.msra.mxu0 0
        %1320 = vmatprep.subr.bf16.mxu0 0
        %1321 = vmatpush1.bf16.msra.mxu0 0
        %1322 = vmatprep.subr.bf16.mxu0 0
        %1323 = vmatpush1.bf16.msra.mxu0 0
        %1324 = vmatprep.subr.bf16.mxu0 0
        %1325 = vmatpush1.bf16.msra.mxu0 0
        %1326 = vmatprep.subr.bf16.mxu0 0
        %1327 = vmatpush1.bf16.msra.mxu0 0
        %1328 = vmatprep.subr.bf16.mxu0 0
        %1329 = vmatpush1.bf16.msra.mxu0 0
        %1330 = vmatprep.subr.bf16.mxu0 0
        %1331 = vmatpush1.bf16.msra.mxu0 0
        %1332 = vmatprep.subr.bf16.mxu0 0
        %1333 = vmatpush1.bf16.msra.mxu0 0
        %1334 = vmatprep.subr.bf16.mxu0 0
        %1335 = vmatpush1.bf16.msra.mxu0 0
        %1336 = vmatprep.subr.bf16.mxu0 0
        %1337 = vmatpush1.bf16.msra.mxu0 0
        %1338 = vmatprep.mubr.bf16.mxu0 0
        %1339 = vmatmul.mubr.bf16.gmra.mrb[0].mxu0 %v656
        %v1340 = vpop.f32.mrb[0].mxu0
        %v1341 = vadd.f32 %v1289, %v1340
        %v1342 = vpop.f32.mrb[0].mxu0
        %v1343 = vpop.f32.mrb[0].mxu0
        %v1344 = vpop.f32.mrb[0].mxu0
        %1345 = vdwg.mxu0
        %v1346 = vld [vmem:[%s10] sm:$0x1]
        %v1348 = vlaneseq
        %v1349 = vshrl.u32 %v1348, 7
        %v1350 = vsub.s32 0, %v1349
        %v1351 = vrot.slane %v1346, %v1350
        %v1353 = vadd.f32 %v1341, %v1351
        %vm1354 = vcmask 523264
        %1355 = vst.msk [vmem:[%s542] sm:$0xff] %vm1354, %v1353
        %v1356 = vld [vmem:[%s549] sm:$0x1]
        %v1357 = vsel %vm1354, %v1353, 0.0
        %v1358 = vrot.slane %v1357, 4
        %v1359 = vadd.f32 %v1357, %v1358
        %v1360 = vrot.slane %v1359, 2
        %v1361 = vadd.f32 %v1359, %v1360
        %v1362 = vrot.slane %v1361, 1
        %v1363 = vadd.f32 %v1361, %v1362
        %v1364 = vadd.f32 %v1356, %v1363
        %vm1365 = vcmask 516096
        %1366 = vst.msk [vmem:[%s549] sm:$0x1] %vm1365, %v1364
        %v1367 = vld [vmem:[%s549 + $0x1] sm:$0x1]
        %v1368 = vmul.f32 %v1353, %v1353
        %v1369 = vsel %vm1354, %v1368, 0.0
        %v1370 = vrot.slane %v1369, 4
        %v1371 = vadd.f32 %v1369, %v1370
        %v1372 = vrot.slane %v1371, 2
        %v1373 = vadd.f32 %v1371, %v1372
        %v1374 = vrot.slane %v1373, 1
        %v1375 = vadd.f32 %v1373, %v1374
        %v1376 = vadd.f32 %v1367, %v1375
        %1377 = vst.msk [vmem:[%s549 + $0x1] sm:$0x1] %vm1365, %v1376
        %s1378 = sand.u32 %s303, 1
        %s1379 = scalar_lea.sflag [#allocation5], %s1378
        %s1380 = sand.u32 %s303, 1
        %s1381 = smul.addr %s1380, 8
        %s1382 = scalar_lea.vmem [#allocation14], %s1381
        %s1383 = sand.u32 %s329, 1
        %s1384 = scalar_lea.sflag [#allocation16], %s1383
        %s1385 = sand.u32 %s329, 1
        %s1386 = smul.addr %s1385, 8
        %s1387 = scalar_lea.vmem [#allocation15], %s1386
        // Predicated region
        $region93: #{tpu_custom_call.1} parent=63 // pred_check
          %p1388 = pneg %p313
        $region94: #{tpu_custom_call.1} parent=63 // pred_check_branch
          %1390 = sbr.rel (%p1388) target = $region96
        $region95: #{tpu_custom_call.1} parent=63 // pred_region
          %s1392 = ssub.s32 128, 128
          %1393 = vsyncadd %s1379, %s1392
          %s1394 = sadd.s32 %s43, %s42
          %s1395 = smul.addr %s1394, 128
          %s1396 = scalar_lea.hbm %s11, %s1395
          %s1398 = sshll.u32 %s1382, 4
          %s1399 = int_to_ptr.vmem [resolvable:$true] %s1398
          %1401 = dma.vmem_to_hbm [thread:$0]  %s1399, 128, %s1396, %s1379
        $region96: #{tpu_custom_call.1} parent=63 // pred_fallthru
          _
        // Predicated region
        $region97: #{tpu_custom_call.1} parent=63 // pred_check
          %p1402 = pneg %p339
        $region98: #{tpu_custom_call.1} parent=63 // pred_check_branch
          %1404 = sbr.rel (%p1402) target = $region100
        $region99: #{tpu_custom_call.1} parent=63 // pred_region
          %s1406 = ssub.s32 128, 128
          %1407 = vsyncadd %s1384, %s1406
          %s1408 = smul.addr %s42, 128
          %s1409 = scalar_lea.hbm %s12, %s1408
          %s1411 = sshll.u32 %s1387, 4
          %s1412 = int_to_ptr.vmem [resolvable:$true] %s1411
          %1414 = dma.vmem_to_hbm [thread:$0]  %s1412, 128, %s1409, %s1384
        $region100: #{tpu_custom_call.1} parent=63 // pred_fallthru
          _
      $region64: #{tpu_custom_call.1} parent=5 // pred_fallthru
        _
      %p1415 = scmp.le.s32.totalorder 2, %s33
      // Predicated region
      $region101: #{tpu_custom_call.1} parent=5 // pred_check
        %p1416 = pneg %p1415
      $region102: #{tpu_custom_call.1} parent=5 // pred_check_branch
        %1418 = sbr.rel (%p1416) target = $region104
      $region103: #{tpu_custom_call.1} parent=5 // pred_region
        %s1419 = ssub.s32 %s33, 2
        // Predicated region
        $region105: #{tpu_custom_call.1} parent=103 // pred_check
          %p1420 = pneg %p319
        $region106: #{tpu_custom_call.1} parent=103 // pred_check_branch
          %1422 = sbr.rel (%p1420) target = $region108
        $region107: #{tpu_custom_call.1} parent=103 // pred_region
          %s1423 = sand.u32 %s304, 1
          %s1424 = scalar_lea.sflag [#allocation5], %s1423
          %s1425 = sand.u32 %s304, 1
          %s1426 = smul.addr %s1425, 8
          %s1427 = scalar_lea.vmem [#allocation14], %s1426
          %1428 = dma.done %s1424, 128
        $region108: #{tpu_custom_call.1} parent=103 // pred_fallthru
          _
        // Predicated region
        $region109: #{tpu_custom_call.1} parent=103 // pred_check
          %p1429 = pneg %p345
        $region110: #{tpu_custom_call.1} parent=103 // pred_check_branch
          %1431 = sbr.rel (%p1429) target = $region112
        $region111: #{tpu_custom_call.1} parent=103 // pred_region
          %s1432 = sand.u32 %s330, 1
          %s1433 = scalar_lea.sflag [#allocation16], %s1432
          %s1434 = sand.u32 %s330, 1
          %s1435 = smul.addr %s1434, 8
          %s1436 = scalar_lea.vmem [#allocation15], %s1435
          %1437 = dma.done %s1433, 128
        $region112: #{tpu_custom_call.1} parent=103 // pred_fallthru
          _
      $region104: #{tpu_custom_call.1} parent=5 // pred_fallthru
        _
    $region6: #{tpu_custom_call.1} parent=1 // loop_footer
      %s37 = sadd.s32 1, %s33
    $region7: #{tpu_custom_call.1} parent=1 // loop_footer_branch
      %32 = sbr.rel target = $region3
    $region8: #{tpu_custom_call.1} parent=1 // loop_exit
      _
    %1438 = vsyncpa [#allocation4], 1
    %s1439 = scalar_lea.sflag [#allocation4], 1
    %1440 = vsyncpa %s1439, 1
    %1441 = vsyncpa [#allocation7], 1
    %s1442 = scalar_lea.sflag [#allocation7], 1
    %1443 = vsyncpa %s1442, 1
    %1444 = vsyncpa [#allocation10], 1
    %1445 = vsyncpa [#allocation13], 1
    %1446 = vsyncpa [#allocation5], 1
    %s1447 = scalar_lea.sflag [#allocation5], 1
    %1448 = vsyncpa %s1447, 1
    %1449 = vsyncpa [#allocation16], 1
    %s1450 = scalar_lea.sflag [#allocation16], 1
    %1451 = vsyncpa %s1450, 1

</llo_original>
